<compile_context>
chip_gen: v6e
topology: v6e:2x2x1
jax: 0.10.0
libtpu: 0.0.40
codegen_flags: <defaults>
</compile_context>

<pallas_src>
import jax
import jax.numpy as jnp
from jax import lax
from jax.experimental import pallas as pl
from jax.experimental.pallas import tpu as pltpu


def debase_encoder_kernel(x_ref, w1_ref, b1_ref, w2_ref, b2_ref,
                          wf_ref, bf_ref, out_ref):
    f32 = jnp.float32
    bf16 = jnp.bfloat16
    x = x_ref[...]                                                # (Bb, 256) bf16

    # conv1 (dense matmul) fused with maxpool1: 4 per-pool-position dots over
    # aligned 256-column weight blocks, running elementwise max.  bias + ReLU
    # are monotone, so applying them once after the max equals
    # max_i relu(dot_i + b).
    m1 = jnp.dot(x, w1_ref[:, 0:256], preferred_element_type=f32)
    for i in range(1, 4):
        m1 = jnp.maximum(
            m1, jnp.dot(x, w1_ref[:, i * 256:(i + 1) * 256],
                        preferred_element_type=f32))
    p1 = jnp.maximum(m1 + b1_ref[...], 0.0).astype(bf16)          # (Bb, 256)

    # conv2 (dense matmul) fused with maxpool2: 4 per-position 128-column dots.
    # Result column order is c*4 + oh*2 + ow == torch NCHW flatten order.
    m2 = jnp.dot(p1, w2_ref[:, 0:128], preferred_element_type=f32)
    for i in range(1, 4):
        m2 = jnp.maximum(
            m2, jnp.dot(p1, w2_ref[:, i * 128:(i + 1) * 128],
                        preferred_element_type=f32))
    p2 = jnp.maximum(m2 + b2_ref[...], 0.0).astype(bf16)          # (Bb, 128)

    # fc + ReLU; dense (Bb, 128) f32 store
    out = jnp.dot(p2, wf_ref[...], preferred_element_type=f32) + bf_ref[...]
    out_ref[...] = jnp.maximum(out, 0.0)


def _conv3x3_as_dense(w, H, W):
    """Express a stride-1 / padding-1 3x3 conv (torch OIHW weight `w`) as a dense
    matrix acting on the NCHW-flattened input.  Weight-only preprocessing,
    O(1) in batch.  Returns (Cin*H*W, Cout, H, W)."""
    cout, cin, kh, kw = w.shape
    hi = jnp.arange(H)
    kh_i = jnp.arange(kh)
    sel_h = (hi[:, None, None] == hi[None, :, None] + kh_i[None, None, :] - 1)
    wi = jnp.arange(W)
    kw_i = jnp.arange(kw)
    sel_w = (wi[:, None, None] == wi[None, :, None] + kw_i[None, None, :] - 1)
    d = jnp.einsum('oikl,hak,wbl->ihwoab', w,
                   sel_h.astype(w.dtype), sel_w.astype(w.dtype))
    return d.reshape(cin * H * W, cout, H, W)


def _pool_grouped_cols(d):
    """Reorder conv-output columns (c, h, w) so the 4 elements of each 2x2
    max-pool window sit in 4 contiguous, lane-aligned column blocks:
      col = ((h%2)*2 + (w%2)) * (C*OH*OW) + c*OH*OW + (h//2)*OW + (w//2)."""
    r, c, h, w = d.shape
    d = d.reshape(r, c, h // 2, 2, w // 2, 2)          # (r, c, oh, a, ow, b)
    d = jnp.transpose(d, (0, 3, 5, 1, 2, 4))           # (r, a, b, c, oh, ow)
    return d.reshape(r, c * h * w)


def preprocess_params(params):
    """One-time weight preprocessing (do this at model init, not per forward)."""
    w1, b1, w2, b2, fcw, fcb = params
    w1k = _pool_grouped_cols(_conv3x3_as_dense(w1, 8, 8)).astype(jnp.bfloat16)
    w2k = _pool_grouped_cols(_conv3x3_as_dense(w2, 4, 4)).astype(jnp.bfloat16)
    b1k = jnp.repeat(b1, 16).reshape(1, 256).astype(jnp.float32)   # per pool-pos block
    b2k = jnp.repeat(b2, 4).reshape(1, 128).astype(jnp.float32)
    wfk = fcw.T.astype(jnp.bfloat16)                                # (128, 128)
    bfk = fcb.reshape(1, 128).astype(jnp.float32)
    return (w1k, b1k, w2k, b2k, wfk, bfk)


def _batch_layout(B):
    """Choose (padded_batch, batch_block).
    Small batches: one block, padded only to a sublane multiple (8).
    Larger batches: 128-aligned blocks up to 512, keeping >= 2 grid steps where
    possible so both v7x TensorCores get work on the "parallel" axis."""
    if B <= 128:
        b_pad = max(8, -(-B // 8) * 8)
        return b_pad, b_pad
    b_pad = -(-B // 128) * 128
    for blk in (512, 384, 256, 128):
        if b_pad % blk == 0 and b_pad // blk >= 2:
            return b_pad, blk
    return b_pad, b_pad


@jax.jit
def debase_encoder_forward(x_nchw, prep):
    """x_nchw: (B, 4, 8, 8) float32.  prep = preprocess_params(torch params)."""
    w1k, b1k, w2k, b2k, wfk, bfk = prep
    B = x_nchw.shape[0]
    b_pad, b_blk = _batch_layout(B)

    # NCHW flatten is a pure view; only the batch is zero-padded.
    x_flat = x_nchw.reshape(B, 256).astype(jnp.bfloat16)
    if b_pad != B:
        x_flat = jnp.pad(x_flat, ((0, b_pad - B), (0, 0)))

    out = pl.pallas_call(
        debase_encoder_kernel,
        out_shape=jax.ShapeDtypeStruct((b_pad, 128), jnp.float32),
        grid=(b_pad // b_blk,),
        in_specs=[
            pl.BlockSpec((b_blk, 256), lambda b: (b, 0)),
            pl.BlockSpec((256, 1024), lambda b: (0, 0)),
            pl.BlockSpec((1, 256), lambda b: (0, 0)),
            pl.BlockSpec((256, 512), lambda b: (0, 0)),
            pl.BlockSpec((1, 128), lambda b: (0, 0)),
            pl.BlockSpec((128, 128), lambda b: (0, 0)),
            pl.BlockSpec((1, 128), lambda b: (0, 0)),
        ],
        out_specs=pl.BlockSpec((b_blk, 128), lambda b: (b, 0)),
        compiler_params=pltpu.CompilerParams(
            dimension_semantics=("parallel",)),
    )(x_flat, w1k, b1k, w2k, b2k, wfk, bfk)
    return out[:B]


def torch_style_reference(x, params):
    """Pure-JAX reference matching the PyTorch module (NCHW) semantics."""
    w1, b1, w2, b2, fcw, fcb = params
    hp = lax.Precision.HIGHEST

    def conv(x, w, b):
        y = lax.conv_general_dilated(
            x, w, window_strides=(1, 1), padding="SAME",
            dimension_numbers=("NCHW", "OIHW", "NCHW"), precision=hp)
        return y + b[None, :, None, None]

    def pool(x):
        return lax.reduce_window(x, -jnp.inf, lax.max,
                                 window_dimensions=(1, 1, 2, 2),
                                 window_strides=(1, 1, 2, 2),
                                 padding="VALID")

    h = pool(jnp.maximum(conv(x, w1, b1), 0.0))
    h = pool(jnp.maximum(conv(h, w2, b2), 0.0))
    flat = h.reshape(h.shape[0], -1)
    return jnp.maximum(jnp.dot(flat, fcw.T, precision=hp) + fcb, 0.0)


if __name__ == "__main__":
    key = jax.random.PRNGKey(0)
    ks = jax.random.split(key, 7)

    # fc expects 32*4 features -> after two 2x2 pools spatial is 2x2 -> input 8x8.
    # B=130 exercises batch padding (130 -> 256) and a 2-step "parallel" grid.
    B = 130
    x = jax.random.normal(ks[0], (B, 4, 8, 8), jnp.float32)

    params = (
        0.10 * jax.random.normal(ks[1], (16, 4, 3, 3), jnp.float32),   # conv1.w
        0.10 * jax.random.normal(ks[2], (16,), jnp.float32),           # conv1.b
        0.10 * jax.random.normal(ks[3], (32, 16, 3, 3), jnp.float32),  # conv2.w
        0.10 * jax.random.normal(ks[4], (32,), jnp.float32),           # conv2.b
        0.05 * jax.random.normal(ks[5], (128, 128), jnp.float32),      # fc.w
        0.05 * jax.random.normal(ks[6], (128,), jnp.float32),          # fc.b
    )

    prep = preprocess_params(params)   # one-time (model init), not per-forward
    y_kernel = jax.block_until_ready(debase_encoder_forward(x, prep))
    y_ref = jax.block_until_ready(torch_style_reference(x, params))

    assert y_kernel.shape == (B, 128), y_kernel.shape
    max_err = float(jnp.max(jnp.abs(y_kernel - y_ref)))
    if max_err > 2e-2:
        raise AssertionError(f"kernel/reference mismatch, max abs err={max_err}")

    print("KERNEL_OK")
</pallas_src>

<mosaic_0001>
module attributes {stable_mosaic.version = 11 : i64} {
  func.func @debase_encoder_kernel(%arg0: i32, %arg1: memref<128x256xbf16, #tpu.memory_space<vmem>>, %arg2: memref<256x1024xbf16, #tpu.memory_space<vmem>>, %arg3: memref<1x256xf32, #tpu.memory_space<vmem>>, %arg4: memref<256x512xbf16, #tpu.memory_space<vmem>>, %arg5: memref<1x128xf32, #tpu.memory_space<vmem>>, %arg6: memref<128x128xbf16, #tpu.memory_space<vmem>>, %arg7: memref<1x128xf32, #tpu.memory_space<vmem>>, %arg8: memref<128x128xf32, #tpu.memory_space<vmem>>) attributes {dimension_semantics = [#tpu.dimension_semantics<parallel>], iteration_bounds = array<i64: 2>, scalar_prefetch = 0 : i64, scratch_operands = 0 : i64, tpu.core_type = #tpu.core_type<tc>, window_params = [{transform_indices = @transform_0, window_bounds = array<i64: 128, 256>}, {pipeline_mode = #tpu.pipeline_mode<synchronous>, transform_indices = @transform_1, window_bounds = array<i64: 256, 1024>}, {pipeline_mode = #tpu.pipeline_mode<synchronous>, transform_indices = @transform_2, window_bounds = array<i64: 1, 256>}, {pipeline_mode = #tpu.pipeline_mode<synchronous>, transform_indices = @transform_3, window_bounds = array<i64: 256, 512>}, {pipeline_mode = #tpu.pipeline_mode<synchronous>, transform_indices = @transform_4, window_bounds = array<i64: 1, 128>}, {pipeline_mode = #tpu.pipeline_mode<synchronous>, transform_indices = @transform_5, window_bounds = array<i64: 128, 128>}, {pipeline_mode = #tpu.pipeline_mode<synchronous>, transform_indices = @transform_6, window_bounds = array<i64: 1, 128>}, {transform_indices = @transform_7, window_bounds = array<i64: 128, 128>}]} {
    %c0 = arith.constant 0 : index
    %c0_0 = arith.constant 0 : index
    %0 = vector.load %arg1[%c0, %c0_0] : memref<128x256xbf16, #tpu.memory_space<vmem>>, vector<128x256xbf16>
    %c0_1 = arith.constant 0 : index
    %c0_2 = arith.constant 0 : index
    %1 = vector.load %arg2[%c0_1, %c0_2] : memref<256x1024xbf16, #tpu.memory_space<vmem>>, vector<256x256xbf16>
    %cst = arith.constant dense<0.000000e+00> : vector<128x256xf32>
    %2 = tpu.matmul %0, %1, %cst {dimension_numbers = #tpu.dot_dimension_numbers<[1], [0], [0], [1], [0, 0, 1, 1], [], []>} : vector<128x256xbf16>, vector<256x256xbf16>, vector<128x256xf32> -> vector<128x256xf32>
    %c0_3 = arith.constant 0 : index
    %c256 = arith.constant 256 : index
    %3 = vector.load %arg2[%c0_3, %c256] : memref<256x1024xbf16, #tpu.memory_space<vmem>>, vector<256x256xbf16>
    %cst_4 = arith.constant dense<0.000000e+00> : vector<128x256xf32>
    %4 = tpu.matmul %0, %3, %cst_4 {dimension_numbers = #tpu.dot_dimension_numbers<[1], [0], [0], [1], [0, 0, 1, 1], [], []>} : vector<128x256xbf16>, vector<256x256xbf16>, vector<128x256xf32> -> vector<128x256xf32>
    %5 = arith.maximumf %2, %4 : vector<128x256xf32>
    %c0_5 = arith.constant 0 : index
    %c512 = arith.constant 512 : index
    %6 = vector.load %arg2[%c0_5, %c512] : memref<256x1024xbf16, #tpu.memory_space<vmem>>, vector<256x256xbf16>
    %cst_6 = arith.constant dense<0.000000e+00> : vector<128x256xf32>
    %7 = tpu.matmul %0, %6, %cst_6 {dimension_numbers = #tpu.dot_dimension_numbers<[1], [0], [0], [1], [0, 0, 1, 1], [], []>} : vector<128x256xbf16>, vector<256x256xbf16>, vector<128x256xf32> -> vector<128x256xf32>
    %8 = arith.maximumf %5, %7 : vector<128x256xf32>
    %c0_7 = arith.constant 0 : index
    %c768 = arith.constant 768 : index
    %9 = vector.load %arg2[%c0_7, %c768] : memref<256x1024xbf16, #tpu.memory_space<vmem>>, vector<256x256xbf16>
    %cst_8 = arith.constant dense<0.000000e+00> : vector<128x256xf32>
    %10 = tpu.matmul %0, %9, %cst_8 {dimension_numbers = #tpu.dot_dimension_numbers<[1], [0], [0], [1], [0, 0, 1, 1], [], []>} : vector<128x256xbf16>, vector<256x256xbf16>, vector<128x256xf32> -> vector<128x256xf32>
    %11 = arith.maximumf %8, %10 : vector<128x256xf32>
    %c0_9 = arith.constant 0 : index
    %c0_10 = arith.constant 0 : index
    %12 = vector.load %arg3[%c0_9, %c0_10] : memref<1x256xf32, #tpu.memory_space<vmem>>, vector<1x256xf32>
    %13 = vector.broadcast %12 : vector<1x256xf32> to vector<128x256xf32>
    %14 = arith.addf %11, %13 : vector<128x256xf32>
    %cst_11 = arith.constant 0.000000e+00 : f32
    %15 = vector.broadcast %cst_11 : f32 to vector<128x256xf32>
    %16 = arith.maximumf %14, %15 : vector<128x256xf32>
    %17 = arith.truncf %16 : vector<128x256xf32> to vector<128x256xbf16>
    %c0_12 = arith.constant 0 : index
    %c0_13 = arith.constant 0 : index
    %18 = vector.load %arg4[%c0_12, %c0_13] : memref<256x512xbf16, #tpu.memory_space<vmem>>, vector<256x128xbf16>
    %cst_14 = arith.constant dense<0.000000e+00> : vector<128x128xf32>
    %19 = tpu.matmul %17, %18, %cst_14 {dimension_numbers = #tpu.dot_dimension_numbers<[1], [0], [0], [1], [0, 0, 1, 1], [], []>} : vector<128x256xbf16>, vector<256x128xbf16>, vector<128x128xf32> -> vector<128x128xf32>
    %c0_15 = arith.constant 0 : index
    %c128 = arith.constant 128 : index
    %20 = vector.load %arg4[%c0_15, %c128] : memref<256x512xbf16, #tpu.memory_space<vmem>>, vector<256x128xbf16>
    %cst_16 = arith.constant dense<0.000000e+00> : vector<128x128xf32>
    %21 = tpu.matmul %17, %20, %cst_16 {dimension_numbers = #tpu.dot_dimension_numbers<[1], [0], [0], [1], [0, 0, 1, 1], [], []>} : vector<128x256xbf16>, vector<256x128xbf16>, vector<128x128xf32> -> vector<128x128xf32>
    %22 = arith.maximumf %19, %21 : vector<128x128xf32>
    %c0_17 = arith.constant 0 : index
    %c256_18 = arith.constant 256 : index
    %23 = vector.load %arg4[%c0_17, %c256_18] : memref<256x512xbf16, #tpu.memory_space<vmem>>, vector<256x128xbf16>
    %cst_19 = arith.constant dense<0.000000e+00> : vector<128x128xf32>
    %24 = tpu.matmul %17, %23, %cst_19 {dimension_numbers = #tpu.dot_dimension_numbers<[1], [0], [0], [1], [0, 0, 1, 1], [], []>} : vector<128x256xbf16>, vector<256x128xbf16>, vector<128x128xf32> -> vector<128x128xf32>
    %25 = arith.maximumf %22, %24 : vector<128x128xf32>
    %c0_20 = arith.constant 0 : index
    %c384 = arith.constant 384 : index
    %26 = vector.load %arg4[%c0_20, %c384] : memref<256x512xbf16, #tpu.memory_space<vmem>>, vector<256x128xbf16>
    %cst_21 = arith.constant dense<0.000000e+00> : vector<128x128xf32>
    %27 = tpu.matmul %17, %26, %cst_21 {dimension_numbers = #tpu.dot_dimension_numbers<[1], [0], [0], [1], [0, 0, 1, 1], [], []>} : vector<128x256xbf16>, vector<256x128xbf16>, vector<128x128xf32> -> vector<128x128xf32>
    %28 = arith.maximumf %25, %27 : vector<128x128xf32>
    %c0_22 = arith.constant 0 : index
    %c0_23 = arith.constant 0 : index
    %29 = vector.load %arg5[%c0_22, %c0_23] : memref<1x128xf32, #tpu.memory_space<vmem>>, vector<1x128xf32>
    %30 = vector.broadcast %29 : vector<1x128xf32> to vector<128x128xf32>
    %31 = arith.addf %28, %30 : vector<128x128xf32>
    %cst_24 = arith.constant 0.000000e+00 : f32
    %32 = vector.broadcast %cst_24 : f32 to vector<128x128xf32>
    %33 = arith.maximumf %31, %32 : vector<128x128xf32>
    %34 = arith.truncf %33 : vector<128x128xf32> to vector<128x128xbf16>
    %c0_25 = arith.constant 0 : index
    %c0_26 = arith.constant 0 : index
    %35 = vector.load %arg6[%c0_25, %c0_26] : memref<128x128xbf16, #tpu.memory_space<vmem>>, vector<128x128xbf16>
    %cst_27 = arith.constant dense<0.000000e+00> : vector<128x128xf32>
    %36 = tpu.matmul %34, %35, %cst_27 {dimension_numbers = #tpu.dot_dimension_numbers<[1], [0], [0], [1], [0, 0, 1, 1], [], []>} : vector<128x128xbf16>, vector<128x128xbf16>, vector<128x128xf32> -> vector<128x128xf32>
    %c0_28 = arith.constant 0 : index
    %c0_29 = arith.constant 0 : index
    %37 = vector.load %arg7[%c0_28, %c0_29] : memref<1x128xf32, #tpu.memory_space<vmem>>, vector<1x128xf32>
    %38 = vector.broadcast %37 : vector<1x128xf32> to vector<128x128xf32>
    %39 = arith.addf %36, %38 : vector<128x128xf32>
    %cst_30 = arith.constant 0.000000e+00 : f32
    %40 = vector.broadcast %cst_30 : f32 to vector<128x128xf32>
    %41 = arith.maximumf %39, %40 : vector<128x128xf32>
    %c0_31 = arith.constant 0 : index
    %c0_32 = arith.constant 0 : index
    %42 = vector.load %arg8[%c0_31, %c0_32] : memref<128x128xf32, #tpu.memory_space<vmem>>, vector<128x128xf32>
    tpu.vector_store %arg8[%c0_31, %c0_32], %41 {strides = array<i32>} : memref<128x128xf32, #tpu.memory_space<vmem>>, vector<128x128xf32>,
    return
  }
  func.func @transform_0(%arg0: i32) -> (i32, i32) {
    %c0_i32 = arith.constant 0 : i32
    %c0_i32_0 = arith.constant 0 : i32
    return %arg0, %c0_i32 : i32, i32
  }
  func.func @transform_1(%arg0: i32) -> (i32, i32) {
    %c0_i32 = arith.constant 0 : i32
    %c0_i32_0 = arith.constant 0 : i32
    %c0_i32_1 = arith.constant 0 : i32
    return %c0_i32, %c0_i32_0 : i32, i32
  }
  func.func @transform_2(%arg0: i32) -> (i32, i32) {
    %c0_i32 = arith.constant 0 : i32
    %c0_i32_0 = arith.constant 0 : i32
    %c0_i32_1 = arith.constant 0 : i32
    return %c0_i32, %c0_i32_0 : i32, i32
  }
  func.func @transform_3(%arg0: i32) -> (i32, i32) {
    %c0_i32 = arith.constant 0 : i32
    %c0_i32_0 = arith.constant 0 : i32
    %c0_i32_1 = arith.constant 0 : i32
    return %c0_i32, %c0_i32_0 : i32, i32
  }
  func.func @transform_4(%arg0: i32) -> (i32, i32) {
    %c0_i32 = arith.constant 0 : i32
    %c0_i32_0 = arith.constant 0 : i32
    %c0_i32_1 = arith.constant 0 : i32
    return %c0_i32, %c0_i32_0 : i32, i32
  }
  func.func @transform_5(%arg0: i32) -> (i32, i32) {
    %c0_i32 = arith.constant 0 : i32
    %c0_i32_0 = arith.constant 0 : i32
    %c0_i32_1 = arith.constant 0 : i32
    return %c0_i32, %c0_i32_0 : i32, i32
  }
  func.func @transform_6(%arg0: i32) -> (i32, i32) {
    %c0_i32 = arith.constant 0 : i32
    %c0_i32_0 = arith.constant 0 : i32
    %c0_i32_1 = arith.constant 0 : i32
    return %c0_i32, %c0_i32_0 : i32, i32
  }
  func.func @transform_7(%arg0: i32) -> (i32, i32) {
    %c0_i32 = arith.constant 0 : i32
    %c0_i32_0 = arith.constant 0 : i32
    return %arg0, %c0_i32 : i32, i32
  }
}

</mosaic_0001>

<llo_original>
// kernel: debase_encoder_forward.1
$region0: #{debase_encoder_forward.1}
  #allocation0 [shape = 'u32[]', space=smem, size = 0x4, offset = 0x4, fixed_abs, tag = 'smem constant byte address 0x4 - core index']
  #allocation1 [shape = 'u32[144,128]{1,0:T(1,128)}', space=vmem, size = 0x12000, scoped, tag = 'internal scratch']
  %s0 = inlined_call_operand.vmem [shape: bf16[256,256], index: 0, kind: input, shape index: {}]
  %s1 = inlined_call_operand.vmem [shape: bf16[256,1024], index: 1, kind: input, shape index: {}]
  %s2 = inlined_call_operand.vmem [shape: f32[1,256], index: 2, kind: input, shape index: {}]
  %s3 = inlined_call_operand.vmem [shape: bf16[256,512], index: 3, kind: input, shape index: {}]
  %s4 = inlined_call_operand.vmem [shape: f32[1,128], index: 4, kind: input, shape index: {}]
  %s5 = inlined_call_operand.hbm [shape: bf16[128,128], index: 5, kind: input, shape index: {}]
  %s6 = inlined_call_operand.vmem [shape: f32[1,128], index: 6, kind: input, shape index: {}]
  %s7 = inlined_call_operand.vmem [shape: f32[256,128], index: 7, kind: output, shape index: {}]
  %s8 = sld [smem:[#allocation0]]
  $region65: #{debase_encoder_forward.1} parent=0
    _
  %s10 = ssub.s32 1, %s8
  %s11 = scalar_select 0, %s10, %s8
  $region1: #{debase_encoder_forward.1} parent=0
    #allocation2 [shape = 'u8[32768]{0}', space=vmem, size = 0x8000, scoped, tag = 'input window, operand 5, single buffered']
    #allocation3 [shape = 's32[2]{0}', space=sflag, size = 0x8, scoped, tag = 'scoped memory for debase_encoder_forward.1']
    %12 = vsyncpa [#allocation3], 0
    loop: start=0, step=1, limit=4
    $region2: #{debase_encoder_forward.1} parent=1 // loop_pre_header
      _
    $region3: #{debase_encoder_forward.1} parent=1 // loop_header
      %s14 = sphi 0, %s18
      %p15 = scmp.ge.s32.totalorder %s14, 4
      %s24 = sphi 0, %s26
      %s27 = sphi 0, %s24
      %s28 = sphi 0, %s27
      %s44 = sphi 0, %s28
      %s48 = sphi 0, %s48
      %s50 = sphi 0, %s48
      %s51 = sphi 0, %s50
      %s65 = sphi 0, %s51
      %s69 = sphi 0, %s69
      %s71 = sphi 0, %s69
      %s72 = sphi 0, %s71
      %s86 = sphi 0, %s72
      %s90 = sphi 0, %s90
      %s92 = sphi 0, %s90
      %s93 = sphi 0, %s92
      %s107 = sphi 0, %s93
      %s111 = sphi 0, %s111
      %s113 = sphi 0, %s111
      %s114 = sphi 0, %s113
      %s128 = sphi 0, %s114
      %s132 = sphi 0, %s132
      %s134 = sphi 0, %s132
      %s135 = sphi 0, %s134
      %s149 = sphi 0, %s135
      %s153 = sphi 0, %s153
      %s155 = sphi 0, %s153
      %s156 = sphi 0, %s155
      %s170 = sphi 0, %s156
      %s176 = sphi 0, %s178
      %s179 = sphi 0, %s176
      %s180 = sphi 0, %s179
      %s196 = sphi 0, %s180
    $region4: #{debase_encoder_forward.1} parent=1 // loop_header_branch
      %17 = sbr.rel (%p15) target = $region8
    $region5: #{debase_encoder_forward.1} parent=1 // loop_body
      %s19 = ssub.s32 %s14, 1
      %s20 = ssub.s32 %s14, 2
      %s21 = sadd.s32 %s14, 1
      %s22 = ssub.s32 %s14, %s21
      %p23 = scmp.eq.s32.totalorder %s22, 0
      %s25 = sadd.s32 %s24, 1
      %s26 = scalar_select %p23, %s24, %s25
      %p29 = pneg %p23
      %p30 = scmp.eq.s32.totalorder %s14, 1
      %p31 = por %p29, %p30
      %p32 = scmp.ne.s32.totalorder %s24, %s27
      %p33 = scmp.eq.s32.totalorder %s14, 0
      %p34 = por %p32, %p33
      %p35 = scmp.ne.s32.totalorder %s24, %s27
      %p36 = scmp.eq.s32.totalorder %s19, 1
      %p37 = por %p35, %p36
      %p38 = scmp.ne.s32.totalorder %s27, %s28
      %p39 = scmp.eq.s32.totalorder %s19, 0
      %p40 = por %p38, %p39
      %p41 = scmp.ne.s32.totalorder %s27, %s28
      %p42 = scmp.eq.s32.totalorder %s20, 1
      %p43 = por %p41, %p42
      %p45 = scmp.ne.s32.totalorder %s28, %s44
      %p46 = scmp.eq.s32.totalorder %s20, 0
      %p47 = por %p45, %p46
      %s49 = sadd.s32 %s48, 1
      %p52 = scmp.eq.s32.totalorder %s14, 1
      %p53 = scmp.ne.s32.totalorder %s48, %s50
      %p54 = scmp.eq.s32.totalorder %s14, 0
      %p55 = por %p53, %p54
      %p56 = scmp.ne.s32.totalorder %s48, %s50
      %p57 = scmp.eq.s32.totalorder %s19, 1
      %p58 = por %p56, %p57
      %p59 = scmp.ne.s32.totalorder %s50, %s51
      %p60 = scmp.eq.s32.totalorder %s19, 0
      %p61 = por %p59, %p60
      %p62 = scmp.ne.s32.totalorder %s50, %s51
      %p63 = scmp.eq.s32.totalorder %s20, 1
      %p64 = por %p62, %p63
      %p66 = scmp.ne.s32.totalorder %s51, %s65
      %p67 = scmp.eq.s32.totalorder %s20, 0
      %p68 = por %p66, %p67
      %s70 = sadd.s32 %s69, 1
      %p73 = scmp.eq.s32.totalorder %s14, 1
      %p74 = scmp.ne.s32.totalorder %s69, %s71
      %p75 = scmp.eq.s32.totalorder %s14, 0
      %p76 = por %p74, %p75
      %p77 = scmp.ne.s32.totalorder %s69, %s71
      %p78 = scmp.eq.s32.totalorder %s19, 1
      %p79 = por %p77, %p78
      %p80 = scmp.ne.s32.totalorder %s71, %s72
      %p81 = scmp.eq.s32.totalorder %s19, 0
      %p82 = por %p80, %p81
      %p83 = scmp.ne.s32.totalorder %s71, %s72
      %p84 = scmp.eq.s32.totalorder %s20, 1
      %p85 = por %p83, %p84
      %p87 = scmp.ne.s32.totalorder %s72, %s86
      %p88 = scmp.eq.s32.totalorder %s20, 0
      %p89 = por %p87, %p88
      %s91 = sadd.s32 %s90, 1
      %p94 = scmp.eq.s32.totalorder %s14, 1
      %p95 = scmp.ne.s32.totalorder %s90, %s92
      %p96 = scmp.eq.s32.totalorder %s14, 0
      %p97 = por %p95, %p96
      %p98 = scmp.ne.s32.totalorder %s90, %s92
      %p99 = scmp.eq.s32.totalorder %s19, 1
      %p100 = por %p98, %p99
      %p101 = scmp.ne.s32.totalorder %s92, %s93
      %p102 = scmp.eq.s32.totalorder %s19, 0
      %p103 = por %p101, %p102
      %p104 = scmp.ne.s32.totalorder %s92, %s93
      %p105 = scmp.eq.s32.totalorder %s20, 1
      %p106 = por %p104, %p105
      %p108 = scmp.ne.s32.totalorder %s93, %s107
      %p109 = scmp.eq.s32.totalorder %s20, 0
      %p110 = por %p108, %p109
      %s112 = sadd.s32 %s111, 1
      %p115 = scmp.eq.s32.totalorder %s14, 1
      %p116 = scmp.ne.s32.totalorder %s111, %s113
      %p117 = scmp.eq.s32.totalorder %s14, 0
      %p118 = por %p116, %p117
      %p119 = scmp.ne.s32.totalorder %s111, %s113
      %p120 = scmp.eq.s32.totalorder %s19, 1
      %p121 = por %p119, %p120
      %p122 = scmp.ne.s32.totalorder %s113, %s114
      %p123 = scmp.eq.s32.totalorder %s19, 0
      %p124 = por %p122, %p123
      %p125 = scmp.ne.s32.totalorder %s113, %s114
      %p126 = scmp.eq.s32.totalorder %s20, 1
      %p127 = por %p125, %p126
      %p129 = scmp.ne.s32.totalorder %s114, %s128
      %p130 = scmp.eq.s32.totalorder %s20, 0
      %p131 = por %p129, %p130
      %s133 = sadd.s32 %s132, 1
      %p136 = scmp.eq.s32.totalorder %s14, 1
      %p137 = scmp.ne.s32.totalorder %s132, %s134
      %p138 = scmp.eq.s32.totalorder %s14, 0
      %p139 = por %p137, %p138
      %p140 = scmp.ne.s32.totalorder %s132, %s134
      %p141 = scmp.eq.s32.totalorder %s19, 1
      %p142 = por %p140, %p141
      %p143 = scmp.ne.s32.totalorder %s134, %s135
      %p144 = scmp.eq.s32.totalorder %s19, 0
      %p145 = por %p143, %p144
      %p146 = scmp.ne.s32.totalorder %s134, %s135
      %p147 = scmp.eq.s32.totalorder %s20, 1
      %p148 = por %p146, %p147
      %p150 = scmp.ne.s32.totalorder %s135, %s149
      %p151 = scmp.eq.s32.totalorder %s20, 0
      %p152 = por %p150, %p151
      %s154 = sadd.s32 %s153, 1
      %p157 = scmp.eq.s32.totalorder %s14, 1
      %p158 = scmp.ne.s32.totalorder %s153, %s155
      %p159 = scmp.eq.s32.totalorder %s14, 0
      %p160 = por %p158, %p159
      %p161 = scmp.ne.s32.totalorder %s153, %s155
      %p162 = scmp.eq.s32.totalorder %s19, 1
      %p163 = por %p161, %p162
      %p164 = scmp.ne.s32.totalorder %s155, %s156
      %p165 = scmp.eq.s32.totalorder %s19, 0
      %p166 = por %p164, %p165
      %p167 = scmp.ne.s32.totalorder %s155, %s156
      %p168 = scmp.eq.s32.totalorder %s20, 1
      %p169 = por %p167, %p168
      %p171 = scmp.ne.s32.totalorder %s156, %s170
      %p172 = scmp.eq.s32.totalorder %s20, 0
      %p173 = por %p171, %p172
      %s174 = ssub.s32 %s14, %s21
      %p175 = scmp.eq.s32.totalorder %s174, 0
      %s177 = sadd.s32 %s176, 1
      %s178 = scalar_select %p175, %s176, %s177
      %p181 = pneg %p175
      %p182 = scmp.eq.s32.totalorder %s14, 1
      %p183 = por %p181, %p182
      %p184 = scmp.ne.s32.totalorder %s176, %s179
      %p185 = scmp.eq.s32.totalorder %s14, 0
      %p186 = por %p184, %p185
      %p187 = scmp.ne.s32.totalorder %s176, %s179
      %p188 = scmp.eq.s32.totalorder %s19, 1
      %p189 = por %p187, %p188
      %p190 = scmp.ne.s32.totalorder %s179, %s180
      %p191 = scmp.eq.s32.totalorder %s19, 0
      %p192 = por %p190, %p191
      %p193 = scmp.ne.s32.totalorder %s179, %s180
      %p194 = scmp.eq.s32.totalorder %s20, 1
      %p195 = por %p193, %p194
      %p197 = scmp.ne.s32.totalorder %s180, %s196
      %p198 = scmp.eq.s32.totalorder %s20, 0
      %p199 = por %p197, %p198
      %p200 = scmp.le.s32.totalorder 1, %s14
      %p201 = scmp.lt.s32.totalorder %s14, 3
      %p202 = pnand %p200, %p201
      %p203 = pneg %p202
      // Predicated region
      $region9: #{debase_encoder_forward.1} parent=5 // pred_check
        _
      $region10: #{debase_encoder_forward.1} parent=5 // pred_check_branch
        %205 = sbr.rel (%p202) target = $region12
      $region11: #{debase_encoder_forward.1} parent=5 // pred_region
        %s206 = ssub.s32 %s14, 1
        // Predicated region
        $region13: #{debase_encoder_forward.1} parent=11 // pred_check
          %p207 = pneg %p61
        $region14: #{debase_encoder_forward.1} parent=11 // pred_check_branch
          %209 = sbr.rel (%p207) target = $region16
        $region15: #{debase_encoder_forward.1} parent=11 // pred_region
          _
        $region16: #{debase_encoder_forward.1} parent=11 // pred_fallthru
          _
        // Predicated region
        $region17: #{debase_encoder_forward.1} parent=11 // pred_check
          %p210 = pneg %p82
        $region18: #{debase_encoder_forward.1} parent=11 // pred_check_branch
          %212 = sbr.rel (%p210) target = $region20
        $region19: #{debase_encoder_forward.1} parent=11 // pred_region
          _
        $region20: #{debase_encoder_forward.1} parent=11 // pred_fallthru
          _
        // Predicated region
        $region21: #{debase_encoder_forward.1} parent=11 // pred_check
          %p213 = pneg %p103
        $region22: #{debase_encoder_forward.1} parent=11 // pred_check_branch
          %215 = sbr.rel (%p213) target = $region24
        $region23: #{debase_encoder_forward.1} parent=11 // pred_region
          _
        $region24: #{debase_encoder_forward.1} parent=11 // pred_fallthru
          _
        // Predicated region
        $region25: #{debase_encoder_forward.1} parent=11 // pred_check
          %p216 = pneg %p124
        $region26: #{debase_encoder_forward.1} parent=11 // pred_check_branch
          %218 = sbr.rel (%p216) target = $region28
        $region27: #{debase_encoder_forward.1} parent=11 // pred_region
          _
        $region28: #{debase_encoder_forward.1} parent=11 // pred_fallthru
          _
        // Predicated region
        $region29: #{debase_encoder_forward.1} parent=11 // pred_check
          %p219 = pneg %p145
        $region30: #{debase_encoder_forward.1} parent=11 // pred_check_branch
          %221 = sbr.rel (%p219) target = $region32
        $region31: #{debase_encoder_forward.1} parent=11 // pred_region
          %s223 = ssub.s32 1024, 1024
          %224 = vsyncadd [#allocation3], %s223
          %s225 = sshll.u32 [#allocation2], 4
          %s226 = int_to_ptr.vmem [resolvable:$true] %s225
          %231 = dma.hbm_to_vmem [thread:$0]  %s5, 1024, %s226, [#allocation3], 64, 64, 4
        $region32: #{debase_encoder_forward.1} parent=11 // pred_fallthru
          _
        // Predicated region
        $region33: #{debase_encoder_forward.1} parent=11 // pred_check
          %p232 = pneg %p166
        $region34: #{debase_encoder_forward.1} parent=11 // pred_check_branch
          %234 = sbr.rel (%p232) target = $region36
        $region35: #{debase_encoder_forward.1} parent=11 // pred_region
          _
        $region36: #{debase_encoder_forward.1} parent=11 // pred_fallthru
          _
      $region12: #{debase_encoder_forward.1} parent=5 // pred_fallthru
        _
      %p235 = scmp.lt.s32.totalorder %s14, 2
      // Predicated region
      $region37: #{debase_encoder_forward.1} parent=5 // pred_check
        %p236 = pneg %p235
      $region38: #{debase_encoder_forward.1} parent=5 // pred_check_branch
        %238 = sbr.rel (%p236) target = $region40
      $region39: #{debase_encoder_forward.1} parent=5 // pred_region
        // Predicated region
        $region41: #{debase_encoder_forward.1} parent=39 // pred_check
          %p239 = pneg %p34
        $region42: #{debase_encoder_forward.1} parent=39 // pred_check_branch
          %241 = sbr.rel (%p239) target = $region44
        $region43: #{debase_encoder_forward.1} parent=39 // pred_region
          %s242 = smul.u32 16, %s14
          %p243 = scmp.lt.s32.totalorder %s242, 31
          %s244 = scalar_select %p243, %s242, 31
          %s245 = smul.addr %s244, 2
          %s246 = smul.addr %s245, 4
          %s247 = scalar_lea.vmem %s0, %s246
          %s248 = smul.u32 16, %s14
        $region44: #{debase_encoder_forward.1} parent=39 // pred_fallthru
          _
      $region40: #{debase_encoder_forward.1} parent=5 // pred_fallthru
        _
      %p249 = scmp.le.s32.totalorder 1, %s14
      %p250 = scmp.lt.s32.totalorder %s14, 3
      %p251 = pnand %p249, %p250
      %p252 = pneg %p251
      // Predicated region
      $region45: #{debase_encoder_forward.1} parent=5 // pred_check
        _
      $region46: #{debase_encoder_forward.1} parent=5 // pred_check_branch
        %254 = sbr.rel (%p251) target = $region48
      $region47: #{debase_encoder_forward.1} parent=5 // pred_region
        %s255 = ssub.s32 %s14, 1
        // Predicated region
        $region49: #{debase_encoder_forward.1} parent=47 // pred_check
          %p256 = pneg %p145
        $region50: #{debase_encoder_forward.1} parent=47 // pred_check_branch
          %258 = sbr.rel (%p256) target = $region52
        $region51: #{debase_encoder_forward.1} parent=47 // pred_region
          %259 = dma.done [#allocation3], 1024
        $region52: #{debase_encoder_forward.1} parent=47 // pred_fallthru
          _
        %s260 = smul.u32 16, %s19
        %p261 = scmp.lt.s32.totalorder %s260, 31
        %s262 = scalar_select %p261, %s260, 31
        %s263 = smul.addr %s262, 2
        %s264 = smul.addr %s263, 4
        %s265 = scalar_lea.vmem %s0, %s264
        %p266 = pneg %p40
        %p267 = pneg %p37
        %p268 = pneg %p61
        %p269 = pneg %p58
        %p270 = pneg %p82
        %p271 = pneg %p79
        %p272 = pneg %p103
        %p273 = pneg %p100
        %p274 = pneg %p124
        %p275 = pneg %p121
        %p276 = pneg %p145
        %p277 = pneg %p142
        %p278 = pneg %p166
        %p279 = pneg %p163
        %p280 = pneg %p192
        %p281 = pneg %p189
        %s282 = smul.u32 16, %s19
        %p283 = scmp.lt.s32.totalorder %s282, 31
        %s284 = scalar_select %p283, %s282, 31
        %s285 = smul.addr %s284, 8
        %s286 = scalar_lea.vmem %s7, %s285
        %s287 = smul.u32 16, %s19
        %p288 = scmp.lt.s32.totalorder %s287, 31
        %s289 = scalar_select %p288, %s287, 31
        %s290 = smul.addr %s289, 2
        %s291 = smul.addr %s290, 4
        %s292 = scalar_lea.vmem %s0, %s291
        %s293 = smul.u32 16, %s19
        %s294 = smul.u32 16, %s19
        %p295 = scmp.lt.s32.totalorder %s294, 31
        %s296 = scalar_select %p295, %s294, 31
        %s297 = smul.addr %s296, 8
        %s298 = scalar_lea.vmem %s7, %s297
        %s299 = smul.u32 16, %s19
        %v301 = vld [vmem:[%s292] sm:$0xff]
        %v302 = vld [vmem:[%s292 + $0x8] sm:$0xff]
        %v303 = vld [vmem:[%s292 + $0x10] sm:$0xff]
        %v304 = vld [vmem:[%s292 + $0x18] sm:$0xff]
        %v305 = vld [vmem:[%s292 + $0x20] sm:$0xff]
        %v306 = vld [vmem:[%s292 + $0x28] sm:$0xff]
        %v307 = vld [vmem:[%s292 + $0x30] sm:$0xff]
        %v308 = vld [vmem:[%s292 + $0x38] sm:$0xff]
        %v309 = vld [vmem:[%s292 + $0x40] sm:$0xff]
        %v310 = vld [vmem:[%s292 + $0x48] sm:$0xff]
        %v311 = vld [vmem:[%s292 + $0x50] sm:$0xff]
        %v312 = vld [vmem:[%s292 + $0x58] sm:$0xff]
        %v313 = vld [vmem:[%s292 + $0x60] sm:$0xff]
        %v314 = vld [vmem:[%s292 + $0x68] sm:$0xff]
        %v315 = vld [vmem:[%s292 + $0x70] sm:$0xff]
        %v316 = vld [vmem:[%s292 + $0x78] sm:$0xff]
        %v317 = vld [vmem:[%s1] sm:$0xff]
        %v318 = vld [vmem:[%s1 + $0x20] sm:$0xff]
        %v319 = vld [vmem:[%s1 + $0x40] sm:$0xff]
        %v320 = vld [vmem:[%s1 + $0x60] sm:$0xff]
        %v321 = vld [vmem:[%s1 + $0x80] sm:$0xff]
        %v322 = vld [vmem:[%s1 + $0xa0] sm:$0xff]
        %v323 = vld [vmem:[%s1 + $0xc0] sm:$0xff]
        %v324 = vld [vmem:[%s1 + $0xe0] sm:$0xff]
        %v325 = vld [vmem:[%s1 + $0x100] sm:$0xff]
        %v326 = vld [vmem:[%s1 + $0x120] sm:$0xff]
        %v327 = vld [vmem:[%s1 + $0x140] sm:$0xff]
        %v328 = vld [vmem:[%s1 + $0x160] sm:$0xff]
        %v329 = vld [vmem:[%s1 + $0x180] sm:$0xff]
        %v330 = vld [vmem:[%s1 + $0x1a0] sm:$0xff]
        %v331 = vld [vmem:[%s1 + $0x1c0] sm:$0xff]
        %v332 = vld [vmem:[%s1 + $0x1e0] sm:$0xff]
        %v333 = vld [vmem:[%s1 + $0x200] sm:$0xff]
        %v334 = vld [vmem:[%s1 + $0x220] sm:$0xff]
        %v335 = vld [vmem:[%s1 + $0x240] sm:$0xff]
        %v336 = vld [vmem:[%s1 + $0x260] sm:$0xff]
        %v337 = vld [vmem:[%s1 + $0x280] sm:$0xff]
        %v338 = vld [vmem:[%s1 + $0x2a0] sm:$0xff]
        %v339 = vld [vmem:[%s1 + $0x2c0] sm:$0xff]
        %v340 = vld [vmem:[%s1 + $0x2e0] sm:$0xff]
        %v341 = vld [vmem:[%s1 + $0x300] sm:$0xff]
        %v342 = vld [vmem:[%s1 + $0x320] sm:$0xff]
        %v343 = vld [vmem:[%s1 + $0x340] sm:$0xff]
        %v344 = vld [vmem:[%s1 + $0x360] sm:$0xff]
        %v345 = vld [vmem:[%s1 + $0x380] sm:$0xff]
        %v346 = vld [vmem:[%s1 + $0x3a0] sm:$0xff]
        %v347 = vld [vmem:[%s1 + $0x3c0] sm:$0xff]
        %v348 = vld [vmem:[%s1 + $0x3e0] sm:$0xff]
        %v365 = vunpack.c.l.b16 %v301
        %v366 = vunpack.c.h.b16 %v301
        %v367 = vunpack.c.l.b16 %v302
        %v368 = vunpack.c.h.b16 %v302
        %v369 = vunpack.c.l.b16 %v303
        %v370 = vunpack.c.h.b16 %v303
        %v371 = vunpack.c.l.b16 %v304
        %v372 = vunpack.c.h.b16 %v304
        %v373 = vunpack.c.l.b16 %v305
        %v374 = vunpack.c.h.b16 %v305
        %v375 = vunpack.c.l.b16 %v306
        %v376 = vunpack.c.h.b16 %v306
        %v377 = vunpack.c.l.b16 %v307
        %v378 = vunpack.c.h.b16 %v307
        %v379 = vunpack.c.l.b16 %v308
        %v380 = vunpack.c.h.b16 %v308
        %v381 = vunpack.c.l.b16 %v309
        %v382 = vunpack.c.h.b16 %v309
        %v383 = vunpack.c.l.b16 %v310
        %v384 = vunpack.c.h.b16 %v310
        %v385 = vunpack.c.l.b16 %v311
        %v386 = vunpack.c.h.b16 %v311
        %v387 = vunpack.c.l.b16 %v312
        %v388 = vunpack.c.h.b16 %v312
        %v389 = vunpack.c.l.b16 %v313
        %v390 = vunpack.c.h.b16 %v313
        %v391 = vunpack.c.l.b16 %v314
        %v392 = vunpack.c.h.b16 %v314
        %v393 = vunpack.c.l.b16 %v315
        %v394 = vunpack.c.h.b16 %v315
        %v395 = vunpack.c.l.b16 %v316
        %v396 = vunpack.c.h.b16 %v316
        %v397 = vpack.c.b16 %v367, %v365
        %v398 = vpack.c.b16 %v368, %v366
        %v399 = vpack.c.b16 %v371, %v369
        %v400 = vpack.c.b16 %v372, %v370
        %v401 = vpack.c.b16 %v375, %v373
        %v402 = vpack.c.b16 %v376, %v374
        %v403 = vpack.c.b16 %v379, %v377
        %v404 = vpack.c.b16 %v380, %v378
        %v405 = vpack.c.b16 %v383, %v381
        %v406 = vpack.c.b16 %v384, %v382
        %v407 = vpack.c.b16 %v387, %v385
        %v408 = vpack.c.b16 %v388, %v386
        %v409 = vpack.c.b16 %v391, %v389
        %v410 = vpack.c.b16 %v392, %v390
        %v411 = vpack.c.b16 %v395, %v393
        %v412 = vpack.c.b16 %v396, %v394
        %v461 = vunpack.c.l.b16 %v317
        %v462 = vunpack.c.h.b16 %v317
        %v463 = vunpack.c.l.b16 %v318
        %v464 = vunpack.c.h.b16 %v318
        %v465 = vunpack.c.l.b16 %v319
        %v466 = vunpack.c.h.b16 %v319
        %v467 = vunpack.c.l.b16 %v320
        %v468 = vunpack.c.h.b16 %v320
        %v469 = vunpack.c.l.b16 %v321
        %v470 = vunpack.c.h.b16 %v321
        %v471 = vunpack.c.l.b16 %v322
        %v472 = vunpack.c.h.b16 %v322
        %v473 = vunpack.c.l.b16 %v323
        %v474 = vunpack.c.h.b16 %v323
        %v475 = vunpack.c.l.b16 %v324
        %v476 = vunpack.c.h.b16 %v324
        %v477 = vunpack.c.l.b16 %v325
        %v478 = vunpack.c.h.b16 %v325
        %v479 = vunpack.c.l.b16 %v326
        %v480 = vunpack.c.h.b16 %v326
        %v481 = vunpack.c.l.b16 %v327
        %v482 = vunpack.c.h.b16 %v327
        %v483 = vunpack.c.l.b16 %v328
        %v484 = vunpack.c.h.b16 %v328
        %v485 = vunpack.c.l.b16 %v329
        %v486 = vunpack.c.h.b16 %v329
        %v487 = vunpack.c.l.b16 %v330
        %v488 = vunpack.c.h.b16 %v330
        %v489 = vunpack.c.l.b16 %v331
        %v490 = vunpack.c.h.b16 %v331
        %v491 = vunpack.c.l.b16 %v332
        %v492 = vunpack.c.h.b16 %v332
        %v493 = vunpack.c.l.b16 %v333
        %v494 = vunpack.c.h.b16 %v333
        %v495 = vunpack.c.l.b16 %v334
        %v496 = vunpack.c.h.b16 %v334
        %v497 = vunpack.c.l.b16 %v335
        %v498 = vunpack.c.h.b16 %v335
        %v499 = vunpack.c.l.b16 %v336
        %v500 = vunpack.c.h.b16 %v336
        %v501 = vunpack.c.l.b16 %v337
        %v502 = vunpack.c.h.b16 %v337
        %v503 = vunpack.c.l.b16 %v338
        %v504 = vunpack.c.h.b16 %v338
        %v505 = vunpack.c.l.b16 %v339
        %v506 = vunpack.c.h.b16 %v339
        %v507 = vunpack.c.l.b16 %v340
        %v508 = vunpack.c.h.b16 %v340
        %v509 = vunpack.c.l.b16 %v341
        %v510 = vunpack.c.h.b16 %v341
        %v511 = vunpack.c.l.b16 %v342
        %v512 = vunpack.c.h.b16 %v342
        %v513 = vunpack.c.l.b16 %v343
        %v514 = vunpack.c.h.b16 %v343
        %v515 = vunpack.c.l.b16 %v344
        %v516 = vunpack.c.h.b16 %v344
        %v517 = vunpack.c.l.b16 %v345
        %v518 = vunpack.c.h.b16 %v345
        %v519 = vunpack.c.l.b16 %v346
        %v520 = vunpack.c.h.b16 %v346
        %v521 = vunpack.c.l.b16 %v347
        %v522 = vunpack.c.h.b16 %v347
        %v523 = vunpack.c.l.b16 %v348
        %v524 = vunpack.c.h.b16 %v348
        %v525 = vpack.c.b16 %v463, %v461
        %v526 = vpack.c.b16 %v464, %v462
        %v527 = vpack.c.b16 %v467, %v465
        %v528 = vpack.c.b16 %v468, %v466
        %v529 = vpack.c.b16 %v471, %v469
        %v530 = vpack.c.b16 %v472, %v470
        %v531 = vpack.c.b16 %v475, %v473
        %v532 = vpack.c.b16 %v476, %v474
        %v533 = vpack.c.b16 %v479, %v477
        %v534 = vpack.c.b16 %v480, %v478
        %v535 = vpack.c.b16 %v483, %v481
        %v536 = vpack.c.b16 %v484, %v482
        %v537 = vpack.c.b16 %v487, %v485
        %v538 = vpack.c.b16 %v488, %v486
        %v539 = vpack.c.b16 %v491, %v489
        %v540 = vpack.c.b16 %v492, %v490
        %v541 = vpack.c.b16 %v495, %v493
        %v542 = vpack.c.b16 %v496, %v494
        %v543 = vpack.c.b16 %v499, %v497
        %v544 = vpack.c.b16 %v500, %v498
        %v545 = vpack.c.b16 %v503, %v501
        %v546 = vpack.c.b16 %v504, %v502
        %v547 = vpack.c.b16 %v507, %v505
        %v548 = vpack.c.b16 %v508, %v506
        %v549 = vpack.c.b16 %v511, %v509
        %v550 = vpack.c.b16 %v512, %v510
        %v551 = vpack.c.b16 %v515, %v513
        %v552 = vpack.c.b16 %v516, %v514
        %v553 = vpack.c.b16 %v519, %v517
        %v554 = vpack.c.b16 %v520, %v518
        %v555 = vpack.c.b16 %v523, %v521
        %v556 = vpack.c.b16 %v524, %v522
        %589 = vmatprep.subr.bf16.mxu0 %v540
        %590 = vmatpush1.bf16.msra.mxu0 %v539
        %591 = vmatprep.subr.bf16.mxu0 %v538
        %592 = vmatpush1.bf16.msra.mxu0 %v537
        %593 = vmatprep.subr.bf16.mxu0 %v536
        %594 = vmatpush1.bf16.msra.mxu0 %v535
        %595 = vmatprep.subr.bf16.mxu0 %v534
        %596 = vmatpush1.bf16.msra.mxu0 %v533
        %597 = vmatprep.subr.bf16.mxu0 %v532
        %598 = vmatpush1.bf16.msra.mxu0 %v531
        %599 = vmatprep.subr.bf16.mxu0 %v530
        %600 = vmatpush1.bf16.msra.mxu0 %v529
        %601 = vmatprep.subr.bf16.mxu0 %v528
        %602 = vmatpush1.bf16.msra.mxu0 %v527
        %603 = vmatprep.subr.bf16.mxu0 %v526
        %604 = vmatpush1.bf16.msra.mxu0 %v525
        %605 = vmatprep.subr.bf16.mxu0 %v556
        %606 = vmatpush2.bf16.msra.mxu0 %v555
        %607 = vmatprep.subr.bf16.mxu0 %v554
        %608 = vmatpush2.bf16.msra.mxu0 %v553
        %609 = vmatprep.subr.bf16.mxu0 %v552
        %610 = vmatpush2.bf16.msra.mxu0 %v551
        %611 = vmatprep.subr.bf16.mxu0 %v550
        %612 = vmatpush2.bf16.msra.mxu0 %v549
        %613 = vmatprep.subr.bf16.mxu0 %v548
        %614 = vmatpush2.bf16.msra.mxu0 %v547
        %615 = vmatprep.subr.bf16.mxu0 %v546
        %616 = vmatpush2.bf16.msra.mxu0 %v545
        %617 = vmatprep.subr.bf16.mxu0 %v544
        %618 = vmatpush2.bf16.msra.mxu0 %v543
        %619 = vmatprep.subr.bf16.mxu0 %v542
        %620 = vmatpush2.bf16.msra.mxu0 %v541
        %621 = vmatprep.mubr.bf16.mxu0 %v398
        %622 = vmatmul.mubr.bf16.gmra.mxu0 %v397
        %v623 = vpop.f32.mrf.mxu0
        %v624 = vadd.f32 0.0, %v623
        %v625 = vpop.f32.mrf.mxu0
        %v626 = vadd.f32 0.0, %v625
        %v627 = vpop.f32.mrf.mxu0
        %v628 = vadd.f32 0.0, %v627
        %v629 = vpop.f32.mrf.mxu0
        %v630 = vadd.f32 0.0, %v629
        %631 = vmatprep.mubr.bf16.mxu0 %v400
        %632 = vmatmul.mubr.bf16.gmra.mxu0 %v399
        %v633 = vpop.f32.mrf.mxu0
        %v634 = vadd.f32 0.0, %v633
        %v635 = vpop.f32.mrf.mxu0
        %v636 = vadd.f32 0.0, %v635
        %v637 = vpop.f32.mrf.mxu0
        %v638 = vadd.f32 0.0, %v637
        %v639 = vpop.f32.mrf.mxu0
        %v640 = vadd.f32 0.0, %v639
        %641 = vmatprep.mubr.bf16.mxu0 %v402
        %642 = vmatmul.mubr.bf16.gmra.mxu0 %v401
        %v643 = vpop.f32.mrf.mxu0
        %v644 = vadd.f32 0.0, %v643
        %v645 = vpop.f32.mrf.mxu0
        %v646 = vadd.f32 0.0, %v645
        %v647 = vpop.f32.mrf.mxu0
        %v648 = vadd.f32 0.0, %v647
        %v649 = vpop.f32.mrf.mxu0
        %v650 = vadd.f32 0.0, %v649
        %651 = vmatprep.mubr.bf16.mxu0 %v404
        %652 = vmatmul.mubr.bf16.gmra.mxu0 %v403
        %v653 = vpop.f32.mrf.mxu0
        %v654 = vadd.f32 0.0, %v653
        %v655 = vpop.f32.mrf.mxu0
        %v656 = vadd.f32 0.0, %v655
        %v657 = vpop.f32.mrf.mxu0
        %v658 = vadd.f32 0.0, %v657
        %v659 = vpop.f32.mrf.mxu0
        %v660 = vadd.f32 0.0, %v659
        %661 = vmatprep.mubr.bf16.mxu0 %v406
        %662 = vmatmul.mubr.bf16.gmra.mxu0 %v405
        %v663 = vpop.f32.mrf.mxu0
        %v664 = vadd.f32 0.0, %v663
        %v665 = vpop.f32.mrf.mxu0
        %v666 = vadd.f32 0.0, %v665
        %v667 = vpop.f32.mrf.mxu0
        %v668 = vadd.f32 0.0, %v667
        %v669 = vpop.f32.mrf.mxu0
        %v670 = vadd.f32 0.0, %v669
        %671 = vmatprep.mubr.bf16.mxu0 %v408
        %672 = vmatmul.mubr.bf16.gmra.mxu0 %v407
        %v673 = vpop.f32.mrf.mxu0
        %v674 = vadd.f32 0.0, %v673
        %v675 = vpop.f32.mrf.mxu0
        %v676 = vadd.f32 0.0, %v675
        %v677 = vpop.f32.mrf.mxu0
        %v678 = vadd.f32 0.0, %v677
        %v679 = vpop.f32.mrf.mxu0
        %v680 = vadd.f32 0.0, %v679
        %681 = vmatprep.mubr.bf16.mxu0 %v410
        %682 = vmatmul.mubr.bf16.gmra.mxu0 %v409
        %v683 = vpop.f32.mrf.mxu0
        %v684 = vadd.f32 0.0, %v683
        %v685 = vpop.f32.mrf.mxu0
        %v686 = vadd.f32 0.0, %v685
        %v687 = vpop.f32.mrf.mxu0
        %v688 = vadd.f32 0.0, %v687
        %v689 = vpop.f32.mrf.mxu0
        %v690 = vadd.f32 0.0, %v689
        %691 = vmatprep.mubr.bf16.mxu0 %v412
        %692 = vmatmul.mubr.bf16.gmra.mxu0 %v411
        %v693 = vpop.f32.mrf.mxu0
        %v694 = vadd.f32 0.0, %v693
        %v695 = vpop.f32.mrf.mxu0
        %v696 = vadd.f32 0.0, %v695
        %v697 = vpop.f32.mrf.mxu0
        %v698 = vadd.f32 0.0, %v697
        %v699 = vpop.f32.mrf.mxu0
        %v700 = vadd.f32 0.0, %v699
        %701 = vdwg.mxu0
        %v702 = vld [vmem:[%s1 + $0x8] sm:$0xff]
        %v703 = vld [vmem:[%s1 + $0x28] sm:$0xff]
        %v704 = vld [vmem:[%s1 + $0x48] sm:$0xff]
        %v705 = vld [vmem:[%s1 + $0x68] sm:$0xff]
        %v706 = vld [vmem:[%s1 + $0x88] sm:$0xff]
        %v707 = vld [vmem:[%s1 + $0xa8] sm:$0xff]
        %v708 = vld [vmem:[%s1 + $0xc8] sm:$0xff]
        %v709 = vld [vmem:[%s1 + $0xe8] sm:$0xff]
        %v710 = vld [vmem:[%s1 + $0x108] sm:$0xff]
        %v711 = vld [vmem:[%s1 + $0x128] sm:$0xff]
        %v712 = vld [vmem:[%s1 + $0x148] sm:$0xff]
        %v713 = vld [vmem:[%s1 + $0x168] sm:$0xff]
        %v714 = vld [vmem:[%s1 + $0x188] sm:$0xff]
        %v715 = vld [vmem:[%s1 + $0x1a8] sm:$0xff]
        %v716 = vld [vmem:[%s1 + $0x1c8] sm:$0xff]
        %v717 = vld [vmem:[%s1 + $0x1e8] sm:$0xff]
        %v718 = vld [vmem:[%s1 + $0x208] sm:$0xff]
        %v719 = vld [vmem:[%s1 + $0x228] sm:$0xff]
        %v720 = vld [vmem:[%s1 + $0x248] sm:$0xff]
        %v721 = vld [vmem:[%s1 + $0x268] sm:$0xff]
        %v722 = vld [vmem:[%s1 + $0x288] sm:$0xff]
        %v723 = vld [vmem:[%s1 + $0x2a8] sm:$0xff]
        %v724 = vld [vmem:[%s1 + $0x2c8] sm:$0xff]
        %v725 = vld [vmem:[%s1 + $0x2e8] sm:$0xff]
        %v726 = vld [vmem:[%s1 + $0x308] sm:$0xff]
        %v727 = vld [vmem:[%s1 + $0x328] sm:$0xff]
        %v728 = vld [vmem:[%s1 + $0x348] sm:$0xff]
        %v729 = vld [vmem:[%s1 + $0x368] sm:$0xff]
        %v730 = vld [vmem:[%s1 + $0x388] sm:$0xff]
        %v731 = vld [vmem:[%s1 + $0x3a8] sm:$0xff]
        %v732 = vld [vmem:[%s1 + $0x3c8] sm:$0xff]
        %v733 = vld [vmem:[%s1 + $0x3e8] sm:$0xff]
        %v766 = vunpack.c.l.b16 %v702
        %v767 = vunpack.c.h.b16 %v702
        %v768 = vunpack.c.l.b16 %v703
        %v769 = vunpack.c.h.b16 %v703
        %v770 = vunpack.c.l.b16 %v704
        %v771 = vunpack.c.h.b16 %v704
        %v772 = vunpack.c.l.b16 %v705
        %v773 = vunpack.c.h.b16 %v705
        %v774 = vunpack.c.l.b16 %v706
        %v775 = vunpack.c.h.b16 %v706
        %v776 = vunpack.c.l.b16 %v707
        %v777 = vunpack.c.h.b16 %v707
        %v778 = vunpack.c.l.b16 %v708
        %v779 = vunpack.c.h.b16 %v708
        %v780 = vunpack.c.l.b16 %v709
        %v781 = vunpack.c.h.b16 %v709
        %v782 = vunpack.c.l.b16 %v710
        %v783 = vunpack.c.h.b16 %v710
        %v784 = vunpack.c.l.b16 %v711
        %v785 = vunpack.c.h.b16 %v711
        %v786 = vunpack.c.l.b16 %v712
        %v787 = vunpack.c.h.b16 %v712
        %v788 = vunpack.c.l.b16 %v713
        %v789 = vunpack.c.h.b16 %v713
        %v790 = vunpack.c.l.b16 %v714
        %v791 = vunpack.c.h.b16 %v714
        %v792 = vunpack.c.l.b16 %v715
        %v793 = vunpack.c.h.b16 %v715
        %v794 = vunpack.c.l.b16 %v716
        %v795 = vunpack.c.h.b16 %v716
        %v796 = vunpack.c.l.b16 %v717
        %v797 = vunpack.c.h.b16 %v717
        %v798 = vunpack.c.l.b16 %v718
        %v799 = vunpack.c.h.b16 %v718
        %v800 = vunpack.c.l.b16 %v719
        %v801 = vunpack.c.h.b16 %v719
        %v802 = vunpack.c.l.b16 %v720
        %v803 = vunpack.c.h.b16 %v720
        %v804 = vunpack.c.l.b16 %v721
        %v805 = vunpack.c.h.b16 %v721
        %v806 = vunpack.c.l.b16 %v722
        %v807 = vunpack.c.h.b16 %v722
        %v808 = vunpack.c.l.b16 %v723
        %v809 = vunpack.c.h.b16 %v723
        %v810 = vunpack.c.l.b16 %v724
        %v811 = vunpack.c.h.b16 %v724
        %v812 = vunpack.c.l.b16 %v725
        %v813 = vunpack.c.h.b16 %v725
        %v814 = vunpack.c.l.b16 %v726
        %v815 = vunpack.c.h.b16 %v726
        %v816 = vunpack.c.l.b16 %v727
        %v817 = vunpack.c.h.b16 %v727
        %v818 = vunpack.c.l.b16 %v728
        %v819 = vunpack.c.h.b16 %v728
        %v820 = vunpack.c.l.b16 %v729
        %v821 = vunpack.c.h.b16 %v729
        %v822 = vunpack.c.l.b16 %v730
        %v823 = vunpack.c.h.b16 %v730
        %v824 = vunpack.c.l.b16 %v731
        %v825 = vunpack.c.h.b16 %v731
        %v826 = vunpack.c.l.b16 %v732
        %v827 = vunpack.c.h.b16 %v732
        %v828 = vunpack.c.l.b16 %v733
        %v829 = vunpack.c.h.b16 %v733
        %v830 = vpack.c.b16 %v768, %v766
        %v831 = vpack.c.b16 %v769, %v767
        %v832 = vpack.c.b16 %v772, %v770
        %v833 = vpack.c.b16 %v773, %v771
        %v834 = vpack.c.b16 %v776, %v774
        %v835 = vpack.c.b16 %v777, %v775
        %v836 = vpack.c.b16 %v780, %v778
        %v837 = vpack.c.b16 %v781, %v779
        %v838 = vpack.c.b16 %v784, %v782
        %v839 = vpack.c.b16 %v785, %v783
        %v840 = vpack.c.b16 %v788, %v786
        %v841 = vpack.c.b16 %v789, %v787
        %v842 = vpack.c.b16 %v792, %v790
        %v843 = vpack.c.b16 %v793, %v791
        %v844 = vpack.c.b16 %v796, %v794
        %v845 = vpack.c.b16 %v797, %v795
        %v846 = vpack.c.b16 %v800, %v798
        %v847 = vpack.c.b16 %v801, %v799
        %v848 = vpack.c.b16 %v804, %v802
        %v849 = vpack.c.b16 %v805, %v803
        %v850 = vpack.c.b16 %v808, %v806
        %v851 = vpack.c.b16 %v809, %v807
        %v852 = vpack.c.b16 %v812, %v810
        %v853 = vpack.c.b16 %v813, %v811
        %v854 = vpack.c.b16 %v816, %v814
        %v855 = vpack.c.b16 %v817, %v815
        %v856 = vpack.c.b16 %v820, %v818
        %v857 = vpack.c.b16 %v821, %v819
        %v858 = vpack.c.b16 %v824, %v822
        %v859 = vpack.c.b16 %v825, %v823
        %v860 = vpack.c.b16 %v828, %v826
        %v861 = vpack.c.b16 %v829, %v827
        %894 = vmatprep.subr.bf16.mxu0 %v845
        %895 = vmatpush1.bf16.msra.mxu0 %v844
        %896 = vmatprep.subr.bf16.mxu0 %v843
        %897 = vmatpush1.bf16.msra.mxu0 %v842
        %898 = vmatprep.subr.bf16.mxu0 %v841
        %899 = vmatpush1.bf16.msra.mxu0 %v840
        %900 = vmatprep.subr.bf16.mxu0 %v839
        %901 = vmatpush1.bf16.msra.mxu0 %v838
        %902 = vmatprep.subr.bf16.mxu0 %v837
        %903 = vmatpush1.bf16.msra.mxu0 %v836
        %904 = vmatprep.subr.bf16.mxu0 %v835
        %905 = vmatpush1.bf16.msra.mxu0 %v834
        %906 = vmatprep.subr.bf16.mxu0 %v833
        %907 = vmatpush1.bf16.msra.mxu0 %v832
        %908 = vmatprep.subr.bf16.mxu0 %v831
        %909 = vmatpush1.bf16.msra.mxu0 %v830
        %910 = vmatprep.subr.bf16.mxu0 %v861
        %911 = vmatpush2.bf16.msra.mxu0 %v860
        %912 = vmatprep.subr.bf16.mxu0 %v859
        %913 = vmatpush2.bf16.msra.mxu0 %v858
        %914 = vmatprep.subr.bf16.mxu0 %v857
        %915 = vmatpush2.bf16.msra.mxu0 %v856
        %916 = vmatprep.subr.bf16.mxu0 %v855
        %917 = vmatpush2.bf16.msra.mxu0 %v854
        %918 = vmatprep.subr.bf16.mxu0 %v853
        %919 = vmatpush2.bf16.msra.mxu0 %v852
        %920 = vmatprep.subr.bf16.mxu0 %v851
        %921 = vmatpush2.bf16.msra.mxu0 %v850
        %922 = vmatprep.subr.bf16.mxu0 %v849
        %923 = vmatpush2.bf16.msra.mxu0 %v848
        %924 = vmatprep.subr.bf16.mxu0 %v847
        %925 = vmatpush2.bf16.msra.mxu0 %v846
        %926 = vmatprep.mubr.bf16.mxu0 %v398
        %927 = vmatmul.mubr.bf16.gmra.mxu0 %v397
        %v928 = vpop.f32.mrf.mxu0
        %v929 = vadd.f32 0.0, %v928
        %v930 = vpop.f32.mrf.mxu0
        %v931 = vadd.f32 0.0, %v930
        %v932 = vpop.f32.mrf.mxu0
        %v933 = vadd.f32 0.0, %v932
        %v934 = vpop.f32.mrf.mxu0
        %v935 = vadd.f32 0.0, %v934
        %936 = vmatprep.mubr.bf16.mxu0 %v400
        %937 = vmatmul.mubr.bf16.gmra.mxu0 %v399
        %v938 = vpop.f32.mrf.mxu0
        %v939 = vadd.f32 0.0, %v938
        %v940 = vpop.f32.mrf.mxu0
        %v941 = vadd.f32 0.0, %v940
        %v942 = vpop.f32.mrf.mxu0
        %v943 = vadd.f32 0.0, %v942
        %v944 = vpop.f32.mrf.mxu0
        %v945 = vadd.f32 0.0, %v944
        %946 = vmatprep.mubr.bf16.mxu0 %v402
        %947 = vmatmul.mubr.bf16.gmra.mxu0 %v401
        %v948 = vpop.f32.mrf.mxu0
        %v949 = vadd.f32 0.0, %v948
        %v950 = vpop.f32.mrf.mxu0
        %v951 = vadd.f32 0.0, %v950
        %v952 = vpop.f32.mrf.mxu0
        %v953 = vadd.f32 0.0, %v952
        %v954 = vpop.f32.mrf.mxu0
        %v955 = vadd.f32 0.0, %v954
        %956 = vmatprep.mubr.bf16.mxu0 %v404
        %957 = vmatmul.mubr.bf16.gmra.mxu0 %v403
        %v958 = vpop.f32.mrf.mxu0
        %v959 = vadd.f32 0.0, %v958
        %v960 = vpop.f32.mrf.mxu0
        %v961 = vadd.f32 0.0, %v960
        %v962 = vpop.f32.mrf.mxu0
        %v963 = vadd.f32 0.0, %v962
        %v964 = vpop.f32.mrf.mxu0
        %v965 = vadd.f32 0.0, %v964
        %966 = vmatprep.mubr.bf16.mxu0 %v406
        %967 = vmatmul.mubr.bf16.gmra.mxu0 %v405
        %v968 = vpop.f32.mrf.mxu0
        %v969 = vadd.f32 0.0, %v968
        %v970 = vpop.f32.mrf.mxu0
        %v971 = vadd.f32 0.0, %v970
        %v972 = vpop.f32.mrf.mxu0
        %v973 = vadd.f32 0.0, %v972
        %v974 = vpop.f32.mrf.mxu0
        %v975 = vadd.f32 0.0, %v974
        %976 = vmatprep.mubr.bf16.mxu0 %v408
        %977 = vmatmul.mubr.bf16.gmra.mxu0 %v407
        %v978 = vpop.f32.mrf.mxu0
        %v979 = vadd.f32 0.0, %v978
        %v980 = vpop.f32.mrf.mxu0
        %v981 = vadd.f32 0.0, %v980
        %v982 = vpop.f32.mrf.mxu0
        %v983 = vadd.f32 0.0, %v982
        %v984 = vpop.f32.mrf.mxu0
        %v985 = vadd.f32 0.0, %v984
        %986 = vmatprep.mubr.bf16.mxu0 %v410
        %987 = vmatmul.mubr.bf16.gmra.mxu0 %v409
        %v988 = vpop.f32.mrf.mxu0
        %v989 = vadd.f32 0.0, %v988
        %v990 = vpop.f32.mrf.mxu0
        %v991 = vadd.f32 0.0, %v990
        %v992 = vpop.f32.mrf.mxu0
        %v993 = vadd.f32 0.0, %v992
        %v994 = vpop.f32.mrf.mxu0
        %v995 = vadd.f32 0.0, %v994
        %996 = vmatprep.mubr.bf16.mxu0 %v412
        %997 = vmatmul.mubr.bf16.gmra.mxu0 %v411
        %v998 = vpop.f32.mrf.mxu0
        %v999 = vadd.f32 0.0, %v998
        %v1000 = vpop.f32.mrf.mxu0
        %v1001 = vadd.f32 0.0, %v1000
        %v1002 = vpop.f32.mrf.mxu0
        %v1003 = vadd.f32 0.0, %v1002
        %v1004 = vpop.f32.mrf.mxu0
        %v1005 = vadd.f32 0.0, %v1004
        %1006 = vdwg.mxu0
        %v1007 = vmax.f32 %v624, %v929
        %v1008 = vmax.f32 %v626, %v931
        %v1009 = vmax.f32 %v628, %v933
        %v1010 = vmax.f32 %v630, %v935
        %v1011 = vmax.f32 %v634, %v939
        %v1012 = vmax.f32 %v636, %v941
        %v1013 = vmax.f32 %v638, %v943
        %v1014 = vmax.f32 %v640, %v945
        %v1015 = vmax.f32 %v644, %v949
        %v1016 = vmax.f32 %v646, %v951
        %v1017 = vmax.f32 %v648, %v953
        %v1018 = vmax.f32 %v650, %v955
        %v1019 = vmax.f32 %v654, %v959
        %v1020 = vmax.f32 %v656, %v961
        %v1021 = vmax.f32 %v658, %v963
        %v1022 = vmax.f32 %v660, %v965
        %v1023 = vmax.f32 %v664, %v969
        %v1024 = vmax.f32 %v666, %v971
        %v1025 = vmax.f32 %v668, %v973
        %v1026 = vmax.f32 %v670, %v975
        %v1027 = vmax.f32 %v674, %v979
        %v1028 = vmax.f32 %v676, %v981
        %v1029 = vmax.f32 %v678, %v983
        %v1030 = vmax.f32 %v680, %v985
        %v1031 = vmax.f32 %v684, %v989
        %v1032 = vmax.f32 %v686, %v991
        %v1033 = vmax.f32 %v688, %v993
        %v1034 = vmax.f32 %v690, %v995
        %v1035 = vmax.f32 %v694, %v999
        %v1036 = vmax.f32 %v696, %v1001
        %v1037 = vmax.f32 %v698, %v1003
        %v1038 = vmax.f32 %v700, %v1005
        %v1039 = vld [vmem:[%s1 + $0x10] sm:$0xff]
        %v1040 = vld [vmem:[%s1 + $0x30] sm:$0xff]
        %v1041 = vld [vmem:[%s1 + $0x50] sm:$0xff]
        %v1042 = vld [vmem:[%s1 + $0x70] sm:$0xff]
        %v1043 = vld [vmem:[%s1 + $0x90] sm:$0xff]
        %v1044 = vld [vmem:[%s1 + $0xb0] sm:$0xff]
        %v1045 = vld [vmem:[%s1 + $0xd0] sm:$0xff]
        %v1046 = vld [vmem:[%s1 + $0xf0] sm:$0xff]
        %v1047 = vld [vmem:[%s1 + $0x110] sm:$0xff]
        %v1048 = vld [vmem:[%s1 + $0x130] sm:$0xff]
        %v1049 = vld [vmem:[%s1 + $0x150] sm:$0xff]
        %v1050 = vld [vmem:[%s1 + $0x170] sm:$0xff]
        %v1051 = vld [vmem:[%s1 + $0x190] sm:$0xff]
        %v1052 = vld [vmem:[%s1 + $0x1b0] sm:$0xff]
        %v1053 = vld [vmem:[%s1 + $0x1d0] sm:$0xff]
        %v1054 = vld [vmem:[%s1 + $0x1f0] sm:$0xff]
        %v1055 = vld [vmem:[%s1 + $0x210] sm:$0xff]
        %v1056 = vld [vmem:[%s1 + $0x230] sm:$0xff]
        %v1057 = vld [vmem:[%s1 + $0x250] sm:$0xff]
        %v1058 = vld [vmem:[%s1 + $0x270] sm:$0xff]
        %v1059 = vld [vmem:[%s1 + $0x290] sm:$0xff]
        %v1060 = vld [vmem:[%s1 + $0x2b0] sm:$0xff]
        %v1061 = vld [vmem:[%s1 + $0x2d0] sm:$0xff]
        %v1062 = vld [vmem:[%s1 + $0x2f0] sm:$0xff]
        %v1063 = vld [vmem:[%s1 + $0x310] sm:$0xff]
        %v1064 = vld [vmem:[%s1 + $0x330] sm:$0xff]
        %v1065 = vld [vmem:[%s1 + $0x350] sm:$0xff]
        %v1066 = vld [vmem:[%s1 + $0x370] sm:$0xff]
        %v1067 = vld [vmem:[%s1 + $0x390] sm:$0xff]
        %v1068 = vld [vmem:[%s1 + $0x3b0] sm:$0xff]
        %v1069 = vld [vmem:[%s1 + $0x3d0] sm:$0xff]
        %v1070 = vld [vmem:[%s1 + $0x3f0] sm:$0xff]
        %v1103 = vunpack.c.l.b16 %v1039
        %v1104 = vunpack.c.h.b16 %v1039
        %v1105 = vunpack.c.l.b16 %v1040
        %v1106 = vunpack.c.h.b16 %v1040
        %v1107 = vunpack.c.l.b16 %v1041
        %v1108 = vunpack.c.h.b16 %v1041
        %v1109 = vunpack.c.l.b16 %v1042
        %v1110 = vunpack.c.h.b16 %v1042
        %v1111 = vunpack.c.l.b16 %v1043
        %v1112 = vunpack.c.h.b16 %v1043
        %v1113 = vunpack.c.l.b16 %v1044
        %v1114 = vunpack.c.h.b16 %v1044
        %v1115 = vunpack.c.l.b16 %v1045
        %v1116 = vunpack.c.h.b16 %v1045
        %v1117 = vunpack.c.l.b16 %v1046
        %v1118 = vunpack.c.h.b16 %v1046
        %v1119 = vunpack.c.l.b16 %v1047
        %v1120 = vunpack.c.h.b16 %v1047
        %v1121 = vunpack.c.l.b16 %v1048
        %v1122 = vunpack.c.h.b16 %v1048
        %v1123 = vunpack.c.l.b16 %v1049
        %v1124 = vunpack.c.h.b16 %v1049
        %v1125 = vunpack.c.l.b16 %v1050
        %v1126 = vunpack.c.h.b16 %v1050
        %v1127 = vunpack.c.l.b16 %v1051
        %v1128 = vunpack.c.h.b16 %v1051
        %v1129 = vunpack.c.l.b16 %v1052
        %v1130 = vunpack.c.h.b16 %v1052
        %v1131 = vunpack.c.l.b16 %v1053
        %v1132 = vunpack.c.h.b16 %v1053
        %v1133 = vunpack.c.l.b16 %v1054
        %v1134 = vunpack.c.h.b16 %v1054
        %v1135 = vunpack.c.l.b16 %v1055
        %v1136 = vunpack.c.h.b16 %v1055
        %v1137 = vunpack.c.l.b16 %v1056
        %v1138 = vunpack.c.h.b16 %v1056
        %v1139 = vunpack.c.l.b16 %v1057
        %v1140 = vunpack.c.h.b16 %v1057
        %v1141 = vunpack.c.l.b16 %v1058
        %v1142 = vunpack.c.h.b16 %v1058
        %v1143 = vunpack.c.l.b16 %v1059
        %v1144 = vunpack.c.h.b16 %v1059
        %v1145 = vunpack.c.l.b16 %v1060
        %v1146 = vunpack.c.h.b16 %v1060
        %v1147 = vunpack.c.l.b16 %v1061
        %v1148 = vunpack.c.h.b16 %v1061
        %v1149 = vunpack.c.l.b16 %v1062
        %v1150 = vunpack.c.h.b16 %v1062
        %v1151 = vunpack.c.l.b16 %v1063
        %v1152 = vunpack.c.h.b16 %v1063
        %v1153 = vunpack.c.l.b16 %v1064
        %v1154 = vunpack.c.h.b16 %v1064
        %v1155 = vunpack.c.l.b16 %v1065
        %v1156 = vunpack.c.h.b16 %v1065
        %v1157 = vunpack.c.l.b16 %v1066
        %v1158 = vunpack.c.h.b16 %v1066
        %v1159 = vunpack.c.l.b16 %v1067
        %v1160 = vunpack.c.h.b16 %v1067
        %v1161 = vunpack.c.l.b16 %v1068
        %v1162 = vunpack.c.h.b16 %v1068
        %v1163 = vunpack.c.l.b16 %v1069
        %v1164 = vunpack.c.h.b16 %v1069
        %v1165 = vunpack.c.l.b16 %v1070
        %v1166 = vunpack.c.h.b16 %v1070
        %v1167 = vpack.c.b16 %v1105, %v1103
        %v1168 = vpack.c.b16 %v1106, %v1104
        %v1169 = vpack.c.b16 %v1109, %v1107
        %v1170 = vpack.c.b16 %v1110, %v1108
        %v1171 = vpack.c.b16 %v1113, %v1111
        %v1172 = vpack.c.b16 %v1114, %v1112
        %v1173 = vpack.c.b16 %v1117, %v1115
        %v1174 = vpack.c.b16 %v1118, %v1116
        %v1175 = vpack.c.b16 %v1121, %v1119
        %v1176 = vpack.c.b16 %v1122, %v1120
        %v1177 = vpack.c.b16 %v1125, %v1123
        %v1178 = vpack.c.b16 %v1126, %v1124
        %v1179 = vpack.c.b16 %v1129, %v1127
        %v1180 = vpack.c.b16 %v1130, %v1128
        %v1181 = vpack.c.b16 %v1133, %v1131
        %v1182 = vpack.c.b16 %v1134, %v1132
        %v1183 = vpack.c.b16 %v1137, %v1135
        %v1184 = vpack.c.b16 %v1138, %v1136
        %v1185 = vpack.c.b16 %v1141, %v1139
        %v1186 = vpack.c.b16 %v1142, %v1140
        %v1187 = vpack.c.b16 %v1145, %v1143
        %v1188 = vpack.c.b16 %v1146, %v1144
        %v1189 = vpack.c.b16 %v1149, %v1147
        %v1190 = vpack.c.b16 %v1150, %v1148
        %v1191 = vpack.c.b16 %v1153, %v1151
        %v1192 = vpack.c.b16 %v1154, %v1152
        %v1193 = vpack.c.b16 %v1157, %v1155
        %v1194 = vpack.c.b16 %v1158, %v1156
        %v1195 = vpack.c.b16 %v1161, %v1159
        %v1196 = vpack.c.b16 %v1162, %v1160
        %v1197 = vpack.c.b16 %v1165, %v1163
        %v1198 = vpack.c.b16 %v1166, %v1164
        %1231 = vmatprep.subr.bf16.mxu0 %v1182
        %1232 = vmatpush1.bf16.msra.mxu0 %v1181
        %1233 = vmatprep.subr.bf16.mxu0 %v1180
        %1234 = vmatpush1.bf16.msra.mxu0 %v1179
        %1235 = vmatprep.subr.bf16.mxu0 %v1178
        %1236 = vmatpush1.bf16.msra.mxu0 %v1177
        %1237 = vmatprep.subr.bf16.mxu0 %v1176
        %1238 = vmatpush1.bf16.msra.mxu0 %v1175
        %1239 = vmatprep.subr.bf16.mxu0 %v1174
        %1240 = vmatpush1.bf16.msra.mxu0 %v1173
        %1241 = vmatprep.subr.bf16.mxu0 %v1172
        %1242 = vmatpush1.bf16.msra.mxu0 %v1171
        %1243 = vmatprep.subr.bf16.mxu0 %v1170
        %1244 = vmatpush1.bf16.msra.mxu0 %v1169
        %1245 = vmatprep.subr.bf16.mxu0 %v1168
        %1246 = vmatpush1.bf16.msra.mxu0 %v1167
        %1247 = vmatprep.subr.bf16.mxu0 %v1198
        %1248 = vmatpush2.bf16.msra.mxu0 %v1197
        %1249 = vmatprep.subr.bf16.mxu0 %v1196
        %1250 = vmatpush2.bf16.msra.mxu0 %v1195
        %1251 = vmatprep.subr.bf16.mxu0 %v1194
        %1252 = vmatpush2.bf16.msra.mxu0 %v1193
        %1253 = vmatprep.subr.bf16.mxu0 %v1192
        %1254 = vmatpush2.bf16.msra.mxu0 %v1191
        %1255 = vmatprep.subr.bf16.mxu0 %v1190
        %1256 = vmatpush2.bf16.msra.mxu0 %v1189
        %1257 = vmatprep.subr.bf16.mxu0 %v1188
        %1258 = vmatpush2.bf16.msra.mxu0 %v1187
        %1259 = vmatprep.subr.bf16.mxu0 %v1186
        %1260 = vmatpush2.bf16.msra.mxu0 %v1185
        %1261 = vmatprep.subr.bf16.mxu0 %v1184
        %1262 = vmatpush2.bf16.msra.mxu0 %v1183
        %1263 = vmatprep.mubr.bf16.mxu0 %v398
        %1264 = vmatmul.mubr.bf16.gmra.mxu0 %v397
        %v1265 = vpop.f32.mrf.mxu0
        %v1266 = vadd.f32 0.0, %v1265
        %v1267 = vpop.f32.mrf.mxu0
        %v1268 = vadd.f32 0.0, %v1267
        %v1269 = vpop.f32.mrf.mxu0
        %v1270 = vadd.f32 0.0, %v1269
        %v1271 = vpop.f32.mrf.mxu0
        %v1272 = vadd.f32 0.0, %v1271
        %1273 = vmatprep.mubr.bf16.mxu0 %v400
        %1274 = vmatmul.mubr.bf16.gmra.mxu0 %v399
        %v1275 = vpop.f32.mrf.mxu0
        %v1276 = vadd.f32 0.0, %v1275
        %v1277 = vpop.f32.mrf.mxu0
        %v1278 = vadd.f32 0.0, %v1277
        %v1279 = vpop.f32.mrf.mxu0
        %v1280 = vadd.f32 0.0, %v1279
        %v1281 = vpop.f32.mrf.mxu0
        %v1282 = vadd.f32 0.0, %v1281
        %1283 = vmatprep.mubr.bf16.mxu0 %v402
        %1284 = vmatmul.mubr.bf16.gmra.mxu0 %v401
        %v1285 = vpop.f32.mrf.mxu0
        %v1286 = vadd.f32 0.0, %v1285
        %v1287 = vpop.f32.mrf.mxu0
        %v1288 = vadd.f32 0.0, %v1287
        %v1289 = vpop.f32.mrf.mxu0
        %v1290 = vadd.f32 0.0, %v1289
        %v1291 = vpop.f32.mrf.mxu0
        %v1292 = vadd.f32 0.0, %v1291
        %1293 = vmatprep.mubr.bf16.mxu0 %v404
        %1294 = vmatmul.mubr.bf16.gmra.mxu0 %v403
        %v1295 = vpop.f32.mrf.mxu0
        %v1296 = vadd.f32 0.0, %v1295
        %v1297 = vpop.f32.mrf.mxu0
        %v1298 = vadd.f32 0.0, %v1297
        %v1299 = vpop.f32.mrf.mxu0
        %v1300 = vadd.f32 0.0, %v1299
        %v1301 = vpop.f32.mrf.mxu0
        %v1302 = vadd.f32 0.0, %v1301
        %1303 = vmatprep.mubr.bf16.mxu0 %v406
        %1304 = vmatmul.mubr.bf16.gmra.mxu0 %v405
        %v1305 = vpop.f32.mrf.mxu0
        %v1306 = vadd.f32 0.0, %v1305
        %v1307 = vpop.f32.mrf.mxu0
        %v1308 = vadd.f32 0.0, %v1307
        %v1309 = vpop.f32.mrf.mxu0
        %v1310 = vadd.f32 0.0, %v1309
        %v1311 = vpop.f32.mrf.mxu0
        %v1312 = vadd.f32 0.0, %v1311
        %1313 = vmatprep.mubr.bf16.mxu0 %v408
        %1314 = vmatmul.mubr.bf16.gmra.mxu0 %v407
        %v1315 = vpop.f32.mrf.mxu0
        %v1316 = vadd.f32 0.0, %v1315
        %v1317 = vpop.f32.mrf.mxu0
        %v1318 = vadd.f32 0.0, %v1317
        %v1319 = vpop.f32.mrf.mxu0
        %v1320 = vadd.f32 0.0, %v1319
        %v1321 = vpop.f32.mrf.mxu0
        %v1322 = vadd.f32 0.0, %v1321
        %1323 = vmatprep.mubr.bf16.mxu0 %v410
        %1324 = vmatmul.mubr.bf16.gmra.mxu0 %v409
        %v1325 = vpop.f32.mrf.mxu0
        %v1326 = vadd.f32 0.0, %v1325
        %v1327 = vpop.f32.mrf.mxu0
        %v1328 = vadd.f32 0.0, %v1327
        %v1329 = vpop.f32.mrf.mxu0
        %v1330 = vadd.f32 0.0, %v1329
        %v1331 = vpop.f32.mrf.mxu0
        %v1332 = vadd.f32 0.0, %v1331
        %1333 = vmatprep.mubr.bf16.mxu0 %v412
        %1334 = vmatmul.mubr.bf16.gmra.mxu0 %v411
        %v1335 = vpop.f32.mrf.mxu0
        %v1336 = vadd.f32 0.0, %v1335
        %v1337 = vpop.f32.mrf.mxu0
        %v1338 = vadd.f32 0.0, %v1337
        %v1339 = vpop.f32.mrf.mxu0
        %v1340 = vadd.f32 0.0, %v1339
        %v1341 = vpop.f32.mrf.mxu0
        %v1342 = vadd.f32 0.0, %v1341
        %1343 = vdwg.mxu0
        %v1344 = vmax.f32 %v1007, %v1266
        %v1345 = vmax.f32 %v1008, %v1268
        %v1346 = vmax.f32 %v1009, %v1270
        %v1347 = vmax.f32 %v1010, %v1272
        %v1348 = vmax.f32 %v1011, %v1276
        %v1349 = vmax.f32 %v1012, %v1278
        %v1350 = vmax.f32 %v1013, %v1280
        %v1351 = vmax.f32 %v1014, %v1282
        %v1352 = vmax.f32 %v1015, %v1286
        %v1353 = vmax.f32 %v1016, %v1288
        %v1354 = vmax.f32 %v1017, %v1290
        %v1355 = vmax.f32 %v1018, %v1292
        %v1356 = vmax.f32 %v1019, %v1296
        %v1357 = vmax.f32 %v1020, %v1298
        %v1358 = vmax.f32 %v1021, %v1300
        %v1359 = vmax.f32 %v1022, %v1302
        %v1360 = vmax.f32 %v1023, %v1306
        %v1361 = vmax.f32 %v1024, %v1308
        %v1362 = vmax.f32 %v1025, %v1310
        %v1363 = vmax.f32 %v1026, %v1312
        %v1364 = vmax.f32 %v1027, %v1316
        %v1365 = vmax.f32 %v1028, %v1318
        %v1366 = vmax.f32 %v1029, %v1320
        %v1367 = vmax.f32 %v1030, %v1322
        %v1368 = vmax.f32 %v1031, %v1326
        %v1369 = vmax.f32 %v1032, %v1328
        %v1370 = vmax.f32 %v1033, %v1330
        %v1371 = vmax.f32 %v1034, %v1332
        %v1372 = vmax.f32 %v1035, %v1336
        %v1373 = vmax.f32 %v1036, %v1338
        %v1374 = vmax.f32 %v1037, %v1340
        %v1375 = vmax.f32 %v1038, %v1342
        %v1376 = vld [vmem:[%s1 + $0x18] sm:$0xff]
        %v1377 = vld [vmem:[%s1 + $0x38] sm:$0xff]
        %v1378 = vld [vmem:[%s1 + $0x58] sm:$0xff]
        %v1379 = vld [vmem:[%s1 + $0x78] sm:$0xff]
        %v1380 = vld [vmem:[%s1 + $0x98] sm:$0xff]
        %v1381 = vld [vmem:[%s1 + $0xb8] sm:$0xff]
        %v1382 = vld [vmem:[%s1 + $0xd8] sm:$0xff]
        %v1383 = vld [vmem:[%s1 + $0xf8] sm:$0xff]
        %v1384 = vld [vmem:[%s1 + $0x118] sm:$0xff]
        %v1385 = vld [vmem:[%s1 + $0x138] sm:$0xff]
        %v1386 = vld [vmem:[%s1 + $0x158] sm:$0xff]
        %v1387 = vld [vmem:[%s1 + $0x178] sm:$0xff]
        %v1388 = vld [vmem:[%s1 + $0x198] sm:$0xff]
        %v1389 = vld [vmem:[%s1 + $0x1b8] sm:$0xff]
        %v1390 = vld [vmem:[%s1 + $0x1d8] sm:$0xff]
        %v1391 = vld [vmem:[%s1 + $0x1f8] sm:$0xff]
        %v1392 = vld [vmem:[%s1 + $0x218] sm:$0xff]
        %v1393 = vld [vmem:[%s1 + $0x238] sm:$0xff]
        %v1394 = vld [vmem:[%s1 + $0x258] sm:$0xff]
        %v1395 = vld [vmem:[%s1 + $0x278] sm:$0xff]
        %v1396 = vld [vmem:[%s1 + $0x298] sm:$0xff]
        %v1397 = vld [vmem:[%s1 + $0x2b8] sm:$0xff]
        %v1398 = vld [vmem:[%s1 + $0x2d8] sm:$0xff]
        %v1399 = vld [vmem:[%s1 + $0x2f8] sm:$0xff]
        %v1400 = vld [vmem:[%s1 + $0x318] sm:$0xff]
        %v1401 = vld [vmem:[%s1 + $0x338] sm:$0xff]
        %v1402 = vld [vmem:[%s1 + $0x358] sm:$0xff]
        %v1403 = vld [vmem:[%s1 + $0x378] sm:$0xff]
        %v1404 = vld [vmem:[%s1 + $0x398] sm:$0xff]
        %v1405 = vld [vmem:[%s1 + $0x3b8] sm:$0xff]
        %v1406 = vld [vmem:[%s1 + $0x3d8] sm:$0xff]
        %v1407 = vld [vmem:[%s1 + $0x3f8] sm:$0xff]
        %v1440 = vunpack.c.l.b16 %v1376
        %v1441 = vunpack.c.h.b16 %v1376
        %v1442 = vunpack.c.l.b16 %v1377
        %v1443 = vunpack.c.h.b16 %v1377
        %v1444 = vunpack.c.l.b16 %v1378
        %v1445 = vunpack.c.h.b16 %v1378
        %v1446 = vunpack.c.l.b16 %v1379
        %v1447 = vunpack.c.h.b16 %v1379
        %v1448 = vunpack.c.l.b16 %v1380
        %v1449 = vunpack.c.h.b16 %v1380
        %v1450 = vunpack.c.l.b16 %v1381
        %v1451 = vunpack.c.h.b16 %v1381
        %v1452 = vunpack.c.l.b16 %v1382
        %v1453 = vunpack.c.h.b16 %v1382
        %v1454 = vunpack.c.l.b16 %v1383
        %v1455 = vunpack.c.h.b16 %v1383
        %v1456 = vunpack.c.l.b16 %v1384
        %v1457 = vunpack.c.h.b16 %v1384
        %v1458 = vunpack.c.l.b16 %v1385
        %v1459 = vunpack.c.h.b16 %v1385
        %v1460 = vunpack.c.l.b16 %v1386
        %v1461 = vunpack.c.h.b16 %v1386
        %v1462 = vunpack.c.l.b16 %v1387
        %v1463 = vunpack.c.h.b16 %v1387
        %v1464 = vunpack.c.l.b16 %v1388
        %v1465 = vunpack.c.h.b16 %v1388
        %v1466 = vunpack.c.l.b16 %v1389
        %v1467 = vunpack.c.h.b16 %v1389
        %v1468 = vunpack.c.l.b16 %v1390
        %v1469 = vunpack.c.h.b16 %v1390
        %v1470 = vunpack.c.l.b16 %v1391
        %v1471 = vunpack.c.h.b16 %v1391
        %v1472 = vunpack.c.l.b16 %v1392
        %v1473 = vunpack.c.h.b16 %v1392
        %v1474 = vunpack.c.l.b16 %v1393
        %v1475 = vunpack.c.h.b16 %v1393
        %v1476 = vunpack.c.l.b16 %v1394
        %v1477 = vunpack.c.h.b16 %v1394
        %v1478 = vunpack.c.l.b16 %v1395
        %v1479 = vunpack.c.h.b16 %v1395
        %v1480 = vunpack.c.l.b16 %v1396
        %v1481 = vunpack.c.h.b16 %v1396
        %v1482 = vunpack.c.l.b16 %v1397
        %v1483 = vunpack.c.h.b16 %v1397
        %v1484 = vunpack.c.l.b16 %v1398
        %v1485 = vunpack.c.h.b16 %v1398
        %v1486 = vunpack.c.l.b16 %v1399
        %v1487 = vunpack.c.h.b16 %v1399
        %v1488 = vunpack.c.l.b16 %v1400
        %v1489 = vunpack.c.h.b16 %v1400
        %v1490 = vunpack.c.l.b16 %v1401
        %v1491 = vunpack.c.h.b16 %v1401
        %v1492 = vunpack.c.l.b16 %v1402
        %v1493 = vunpack.c.h.b16 %v1402
        %v1494 = vunpack.c.l.b16 %v1403
        %v1495 = vunpack.c.h.b16 %v1403
        %v1496 = vunpack.c.l.b16 %v1404
        %v1497 = vunpack.c.h.b16 %v1404
        %v1498 = vunpack.c.l.b16 %v1405
        %v1499 = vunpack.c.h.b16 %v1405
        %v1500 = vunpack.c.l.b16 %v1406
        %v1501 = vunpack.c.h.b16 %v1406
        %v1502 = vunpack.c.l.b16 %v1407
        %v1503 = vunpack.c.h.b16 %v1407
        %v1504 = vpack.c.b16 %v1442, %v1440
        %v1505 = vpack.c.b16 %v1443, %v1441
        %v1506 = vpack.c.b16 %v1446, %v1444
        %v1507 = vpack.c.b16 %v1447, %v1445
        %v1508 = vpack.c.b16 %v1450, %v1448
        %v1509 = vpack.c.b16 %v1451, %v1449
        %v1510 = vpack.c.b16 %v1454, %v1452
        %v1511 = vpack.c.b16 %v1455, %v1453
        %v1512 = vpack.c.b16 %v1458, %v1456
        %v1513 = vpack.c.b16 %v1459, %v1457
        %v1514 = vpack.c.b16 %v1462, %v1460
        %v1515 = vpack.c.b16 %v1463, %v1461
        %v1516 = vpack.c.b16 %v1466, %v1464
        %v1517 = vpack.c.b16 %v1467, %v1465
        %v1518 = vpack.c.b16 %v1470, %v1468
        %v1519 = vpack.c.b16 %v1471, %v1469
        %v1520 = vpack.c.b16 %v1474, %v1472
        %v1521 = vpack.c.b16 %v1475, %v1473
        %v1522 = vpack.c.b16 %v1478, %v1476
        %v1523 = vpack.c.b16 %v1479, %v1477
        %v1524 = vpack.c.b16 %v1482, %v1480
        %v1525 = vpack.c.b16 %v1483, %v1481
        %v1526 = vpack.c.b16 %v1486, %v1484
        %v1527 = vpack.c.b16 %v1487, %v1485
        %v1528 = vpack.c.b16 %v1490, %v1488
        %v1529 = vpack.c.b16 %v1491, %v1489
        %v1530 = vpack.c.b16 %v1494, %v1492
        %v1531 = vpack.c.b16 %v1495, %v1493
        %v1532 = vpack.c.b16 %v1498, %v1496
        %v1533 = vpack.c.b16 %v1499, %v1497
        %v1534 = vpack.c.b16 %v1502, %v1500
        %v1535 = vpack.c.b16 %v1503, %v1501
        %1568 = vmatprep.subr.bf16.mxu0 %v1519
        %1569 = vmatpush1.bf16.msra.mxu0 %v1518
        %1570 = vmatprep.subr.bf16.mxu0 %v1517
        %1571 = vmatpush1.bf16.msra.mxu0 %v1516
        %1572 = vmatprep.subr.bf16.mxu0 %v1515
        %1573 = vmatpush1.bf16.msra.mxu0 %v1514
        %1574 = vmatprep.subr.bf16.mxu0 %v1513
        %1575 = vmatpush1.bf16.msra.mxu0 %v1512
        %1576 = vmatprep.subr.bf16.mxu0 %v1511
        %1577 = vmatpush1.bf16.msra.mxu0 %v1510
        %1578 = vmatprep.subr.bf16.mxu0 %v1509
        %1579 = vmatpush1.bf16.msra.mxu0 %v1508
        %1580 = vmatprep.subr.bf16.mxu0 %v1507
        %1581 = vmatpush1.bf16.msra.mxu0 %v1506
        %1582 = vmatprep.subr.bf16.mxu0 %v1505
        %1583 = vmatpush1.bf16.msra.mxu0 %v1504
        %1584 = vmatprep.subr.bf16.mxu0 %v1535
        %1585 = vmatpush2.bf16.msra.mxu0 %v1534
        %1586 = vmatprep.subr.bf16.mxu0 %v1533
        %1587 = vmatpush2.bf16.msra.mxu0 %v1532
        %1588 = vmatprep.subr.bf16.mxu0 %v1531
        %1589 = vmatpush2.bf16.msra.mxu0 %v1530
        %1590 = vmatprep.subr.bf16.mxu0 %v1529
        %1591 = vmatpush2.bf16.msra.mxu0 %v1528
        %1592 = vmatprep.subr.bf16.mxu0 %v1527
        %1593 = vmatpush2.bf16.msra.mxu0 %v1526
        %1594 = vmatprep.subr.bf16.mxu0 %v1525
        %1595 = vmatpush2.bf16.msra.mxu0 %v1524
        %1596 = vmatprep.subr.bf16.mxu0 %v1523
        %1597 = vmatpush2.bf16.msra.mxu0 %v1522
        %1598 = vmatprep.subr.bf16.mxu0 %v1521
        %1599 = vmatpush2.bf16.msra.mxu0 %v1520
        %1600 = vmatprep.mubr.bf16.mxu0 %v398
        %1601 = vmatmul.mubr.bf16.gmra.mxu0 %v397
        %v1602 = vpop.f32.mrf.mxu0
        %v1603 = vadd.f32 0.0, %v1602
        %v1604 = vpop.f32.mrf.mxu0
        %v1605 = vadd.f32 0.0, %v1604
        %v1606 = vpop.f32.mrf.mxu0
        %v1607 = vadd.f32 0.0, %v1606
        %v1608 = vpop.f32.mrf.mxu0
        %v1609 = vadd.f32 0.0, %v1608
        %1610 = vmatprep.mubr.bf16.mxu0 %v400
        %1611 = vmatmul.mubr.bf16.gmra.mxu0 %v399
        %v1612 = vpop.f32.mrf.mxu0
        %v1613 = vadd.f32 0.0, %v1612
        %v1614 = vpop.f32.mrf.mxu0
        %v1615 = vadd.f32 0.0, %v1614
        %v1616 = vpop.f32.mrf.mxu0
        %v1617 = vadd.f32 0.0, %v1616
        %v1618 = vpop.f32.mrf.mxu0
        %v1619 = vadd.f32 0.0, %v1618
        %1620 = vmatprep.mubr.bf16.mxu0 %v402
        %1621 = vmatmul.mubr.bf16.gmra.mxu0 %v401
        %v1622 = vpop.f32.mrf.mxu0
        %v1623 = vadd.f32 0.0, %v1622
        %v1624 = vpop.f32.mrf.mxu0
        %v1625 = vadd.f32 0.0, %v1624
        %v1626 = vpop.f32.mrf.mxu0
        %v1627 = vadd.f32 0.0, %v1626
        %v1628 = vpop.f32.mrf.mxu0
        %v1629 = vadd.f32 0.0, %v1628
        %1630 = vmatprep.mubr.bf16.mxu0 %v404
        %1631 = vmatmul.mubr.bf16.gmra.mxu0 %v403
        %v1632 = vpop.f32.mrf.mxu0
        %v1633 = vadd.f32 0.0, %v1632
        %v1634 = vpop.f32.mrf.mxu0
        %v1635 = vadd.f32 0.0, %v1634
        %v1636 = vpop.f32.mrf.mxu0
        %v1637 = vadd.f32 0.0, %v1636
        %v1638 = vpop.f32.mrf.mxu0
        %v1639 = vadd.f32 0.0, %v1638
        %1640 = vmatprep.mubr.bf16.mxu0 %v406
        %1641 = vmatmul.mubr.bf16.gmra.mxu0 %v405
        %v1642 = vpop.f32.mrf.mxu0
        %v1643 = vadd.f32 0.0, %v1642
        %v1644 = vpop.f32.mrf.mxu0
        %v1645 = vadd.f32 0.0, %v1644
        %v1646 = vpop.f32.mrf.mxu0
        %v1647 = vadd.f32 0.0, %v1646
        %v1648 = vpop.f32.mrf.mxu0
        %v1649 = vadd.f32 0.0, %v1648
        %1650 = vmatprep.mubr.bf16.mxu0 %v408
        %1651 = vmatmul.mubr.bf16.gmra.mxu0 %v407
        %v1652 = vpop.f32.mrf.mxu0
        %v1653 = vadd.f32 0.0, %v1652
        %v1654 = vpop.f32.mrf.mxu0
        %v1655 = vadd.f32 0.0, %v1654
        %v1656 = vpop.f32.mrf.mxu0
        %v1657 = vadd.f32 0.0, %v1656
        %v1658 = vpop.f32.mrf.mxu0
        %v1659 = vadd.f32 0.0, %v1658
        %1660 = vmatprep.mubr.bf16.mxu0 %v410
        %1661 = vmatmul.mubr.bf16.gmra.mxu0 %v409
        %v1662 = vpop.f32.mrf.mxu0
        %v1663 = vadd.f32 0.0, %v1662
        %v1664 = vpop.f32.mrf.mxu0
        %v1665 = vadd.f32 0.0, %v1664
        %v1666 = vpop.f32.mrf.mxu0
        %v1667 = vadd.f32 0.0, %v1666
        %v1668 = vpop.f32.mrf.mxu0
        %v1669 = vadd.f32 0.0, %v1668
        %1670 = vmatprep.mubr.bf16.mxu0 %v412
        %1671 = vmatmul.mubr.bf16.gmra.mxu0 %v411
        %v1672 = vpop.f32.mrf.mxu0
        %v1673 = vadd.f32 0.0, %v1672
        %v1674 = vpop.f32.mrf.mxu0
        %v1675 = vadd.f32 0.0, %v1674
        %v1676 = vpop.f32.mrf.mxu0
        %v1677 = vadd.f32 0.0, %v1676
        %v1678 = vpop.f32.mrf.mxu0
        %v1679 = vadd.f32 0.0, %v1678
        %1680 = vdwg.mxu0
        %v1681 = vmax.f32 %v1344, %v1603
        %v1682 = vmax.f32 %v1345, %v1605
        %v1683 = vmax.f32 %v1346, %v1607
        %v1684 = vmax.f32 %v1347, %v1609
        %v1685 = vmax.f32 %v1348, %v1613
        %v1686 = vmax.f32 %v1349, %v1615
        %v1687 = vmax.f32 %v1350, %v1617
        %v1688 = vmax.f32 %v1351, %v1619
        %v1689 = vmax.f32 %v1352, %v1623
        %v1690 = vmax.f32 %v1353, %v1625
        %v1691 = vmax.f32 %v1354, %v1627
        %v1692 = vmax.f32 %v1355, %v1629
        %v1693 = vmax.f32 %v1356, %v1633
        %v1694 = vmax.f32 %v1357, %v1635
        %v1695 = vmax.f32 %v1358, %v1637
        %v1696 = vmax.f32 %v1359, %v1639
        %v1697 = vmax.f32 %v1360, %v1643
        %v1698 = vmax.f32 %v1361, %v1645
        %v1699 = vmax.f32 %v1362, %v1647
        %v1700 = vmax.f32 %v1363, %v1649
        %v1701 = vmax.f32 %v1364, %v1653
        %v1702 = vmax.f32 %v1365, %v1655
        %v1703 = vmax.f32 %v1366, %v1657
        %v1704 = vmax.f32 %v1367, %v1659
        %v1705 = vmax.f32 %v1368, %v1663
        %v1706 = vmax.f32 %v1369, %v1665
        %v1707 = vmax.f32 %v1370, %v1667
        %v1708 = vmax.f32 %v1371, %v1669
        %v1709 = vmax.f32 %v1372, %v1673
        %v1710 = vmax.f32 %v1373, %v1675
        %v1711 = vmax.f32 %v1374, %v1677
        %v1712 = vmax.f32 %v1375, %v1679
        %v1713 = vld [vmem:[%s2] sm:$0x3]
        %v1715 = vlaneseq
        %v1716 = vshrl.u32 %v1715, 7
        %v1717 = vsub.s32 0, %v1716
        %v1718 = vrot.slane %v1713, %v1717
        %v1719 = vlaneseq
        %v1720 = vshrl.u32 %v1719, 7
        %v1721 = vsub.s32 1, %v1720
        %v1722 = vrot.slane %v1713, %v1721
        %v1725 = vadd.f32 %v1681, %v1718
        %v1726 = vadd.f32 %v1682, %v1722
        %v1727 = vadd.f32 %v1683, %v1718
        %v1728 = vadd.f32 %v1684, %v1722
        %v1729 = vadd.f32 %v1685, %v1718
        %v1730 = vadd.f32 %v1686, %v1722
        %v1731 = vadd.f32 %v1687, %v1718
        %v1732 = vadd.f32 %v1688, %v1722
        %v1733 = vadd.f32 %v1689, %v1718
        %v1734 = vadd.f32 %v1690, %v1722
        %v1735 = vadd.f32 %v1691, %v1718
        %v1736 = vadd.f32 %v1692, %v1722
        %v1737 = vadd.f32 %v1693, %v1718
        %v1738 = vadd.f32 %v1694, %v1722
        %v1739 = vadd.f32 %v1695, %v1718
        %v1740 = vadd.f32 %v1696, %v1722
        %v1741 = vadd.f32 %v1697, %v1718
        %v1742 = vadd.f32 %v1698, %v1722
        %v1743 = vadd.f32 %v1699, %v1718
        %v1744 = vadd.f32 %v1700, %v1722
        %v1745 = vadd.f32 %v1701, %v1718
        %v1746 = vadd.f32 %v1702, %v1722
        %v1747 = vadd.f32 %v1703, %v1718
        %v1748 = vadd.f32 %v1704, %v1722
        %v1749 = vadd.f32 %v1705, %v1718
        %v1750 = vadd.f32 %v1706, %v1722
        %v1751 = vadd.f32 %v1707, %v1718
        %v1752 = vadd.f32 %v1708, %v1722
        %v1753 = vadd.f32 %v1709, %v1718
        %v1754 = vadd.f32 %v1710, %v1722
        %v1755 = vadd.f32 %v1711, %v1718
        %v1756 = vadd.f32 %v1712, %v1722
        %v1757 = vmax.f32 %v1725, 0.0
        %v1758 = vmax.f32 %v1726, 0.0
        %v1759 = vmax.f32 %v1727, 0.0
        %v1760 = vmax.f32 %v1728, 0.0
        %v1761 = vmax.f32 %v1729, 0.0
        %v1762 = vmax.f32 %v1730, 0.0
        %v1763 = vmax.f32 %v1731, 0.0
        %v1764 = vmax.f32 %v1732, 0.0
        %v1765 = vmax.f32 %v1733, 0.0
        %v1766 = vmax.f32 %v1734, 0.0
        %v1767 = vmax.f32 %v1735, 0.0
        %v1768 = vmax.f32 %v1736, 0.0
        %v1769 = vmax.f32 %v1737, 0.0
        %v1770 = vmax.f32 %v1738, 0.0
        %v1771 = vmax.f32 %v1739, 0.0
        %v1772 = vmax.f32 %v1740, 0.0
        %v1773 = vmax.f32 %v1741, 0.0
        %v1774 = vmax.f32 %v1742, 0.0
        %v1775 = vmax.f32 %v1743, 0.0
        %v1776 = vmax.f32 %v1744, 0.0
        %v1777 = vmax.f32 %v1745, 0.0
        %v1778 = vmax.f32 %v1746, 0.0
        %v1779 = vmax.f32 %v1747, 0.0
        %v1780 = vmax.f32 %v1748, 0.0
        %v1781 = vmax.f32 %v1749, 0.0
        %v1782 = vmax.f32 %v1750, 0.0
        %v1783 = vmax.f32 %v1751, 0.0
        %v1784 = vmax.f32 %v1752, 0.0
        %v1785 = vmax.f32 %v1753, 0.0
        %v1786 = vmax.f32 %v1754, 0.0
        %v1787 = vmax.f32 %v1755, 0.0
        %v1788 = vmax.f32 %v1756, 0.0
        %v1789 = vpack.c.bf16 %v1759, %v1757
        %v1790 = vpack.c.bf16 %v1760, %v1758
        %v1791 = vpack.c.bf16 %v1763, %v1761
        %v1792 = vpack.c.bf16 %v1764, %v1762
        %v1793 = vpack.c.bf16 %v1767, %v1765
        %v1794 = vpack.c.bf16 %v1768, %v1766
        %v1795 = vpack.c.bf16 %v1771, %v1769
        %v1796 = vpack.c.bf16 %v1772, %v1770
        %v1797 = vpack.c.bf16 %v1775, %v1773
        %v1798 = vpack.c.bf16 %v1776, %v1774
        %v1799 = vpack.c.bf16 %v1779, %v1777
        %v1800 = vpack.c.bf16 %v1780, %v1778
        %v1801 = vpack.c.bf16 %v1783, %v1781
        %v1802 = vpack.c.bf16 %v1784, %v1782
        %v1803 = vpack.c.bf16 %v1787, %v1785
        %v1804 = vpack.c.bf16 %v1788, %v1786
        %v1805 = vld [vmem:[%s3] sm:$0xf]
        %v1806 = vld [vmem:[%s3 + $0x10] sm:$0xf]
        %v1807 = vld [vmem:[%s3 + $0x20] sm:$0xf]
        %v1808 = vld [vmem:[%s3 + $0x30] sm:$0xf]
        %v1809 = vld [vmem:[%s3 + $0x40] sm:$0xf]
        %v1810 = vld [vmem:[%s3 + $0x50] sm:$0xf]
        %v1811 = vld [vmem:[%s3 + $0x60] sm:$0xf]
        %v1812 = vld [vmem:[%s3 + $0x70] sm:$0xf]
        %v1813 = vld [vmem:[%s3 + $0x80] sm:$0xf]
        %v1814 = vld [vmem:[%s3 + $0x90] sm:$0xf]
        %v1815 = vld [vmem:[%s3 + $0xa0] sm:$0xf]
        %v1816 = vld [vmem:[%s3 + $0xb0] sm:$0xf]
        %v1817 = vld [vmem:[%s3 + $0xc0] sm:$0xf]
        %v1818 = vld [vmem:[%s3 + $0xd0] sm:$0xf]
        %v1819 = vld [vmem:[%s3 + $0xe0] sm:$0xf]
        %v1820 = vld [vmem:[%s3 + $0xf0] sm:$0xf]
        %v1821 = vld [vmem:[%s3 + $0x100] sm:$0xf]
        %v1822 = vld [vmem:[%s3 + $0x110] sm:$0xf]
        %v1823 = vld [vmem:[%s3 + $0x120] sm:$0xf]
        %v1824 = vld [vmem:[%s3 + $0x130] sm:$0xf]
        %v1825 = vld [vmem:[%s3 + $0x140] sm:$0xf]
        %v1826 = vld [vmem:[%s3 + $0x150] sm:$0xf]
        %v1827 = vld [vmem:[%s3 + $0x160] sm:$0xf]
        %v1828 = vld [vmem:[%s3 + $0x170] sm:$0xf]
        %v1829 = vld [vmem:[%s3 + $0x180] sm:$0xf]
        %v1830 = vld [vmem:[%s3 + $0x190] sm:$0xf]
        %v1831 = vld [vmem:[%s3 + $0x1a0] sm:$0xf]
        %v1832 = vld [vmem:[%s3 + $0x1b0] sm:$0xf]
        %v1833 = vld [vmem:[%s3 + $0x1c0] sm:$0xf]
        %v1834 = vld [vmem:[%s3 + $0x1d0] sm:$0xf]
        %v1835 = vld [vmem:[%s3 + $0x1e0] sm:$0xf]
        %v1836 = vld [vmem:[%s3 + $0x1f0] sm:$0xf]
        %v1869 = vunpack.c.l.b16 %v1805
        %v1870 = vunpack.c.l.b16 %v1806
        %v1871 = vunpack.c.l.b16 %v1807
        %v1872 = vunpack.c.l.b16 %v1808
        %v1873 = vunpack.c.l.b16 %v1809
        %v1874 = vunpack.c.l.b16 %v1810
        %v1875 = vunpack.c.l.b16 %v1811
        %v1876 = vunpack.c.l.b16 %v1812
        %v1877 = vunpack.c.l.b16 %v1813
        %v1878 = vunpack.c.l.b16 %v1814
        %v1879 = vunpack.c.l.b16 %v1815
        %v1880 = vunpack.c.l.b16 %v1816
        %v1881 = vunpack.c.l.b16 %v1817
        %v1882 = vunpack.c.l.b16 %v1818
        %v1883 = vunpack.c.l.b16 %v1819
        %v1884 = vunpack.c.l.b16 %v1820
        %v1885 = vunpack.c.l.b16 %v1821
        %v1886 = vunpack.c.l.b16 %v1822
        %v1887 = vunpack.c.l.b16 %v1823
        %v1888 = vunpack.c.l.b16 %v1824
        %v1889 = vunpack.c.l.b16 %v1825
        %v1890 = vunpack.c.l.b16 %v1826
        %v1891 = vunpack.c.l.b16 %v1827
        %v1892 = vunpack.c.l.b16 %v1828
        %v1893 = vunpack.c.l.b16 %v1829
        %v1894 = vunpack.c.l.b16 %v1830
        %v1895 = vunpack.c.l.b16 %v1831
        %v1896 = vunpack.c.l.b16 %v1832
        %v1897 = vunpack.c.l.b16 %v1833
        %v1898 = vunpack.c.l.b16 %v1834
        %v1899 = vunpack.c.l.b16 %v1835
        %v1900 = vunpack.c.l.b16 %v1836
        %v1901 = vpack.c.b16 %v1870, %v1869
        %v1902 = vpack.c.b16 %v1872, %v1871
        %v1903 = vpack.c.b16 %v1874, %v1873
        %v1904 = vpack.c.b16 %v1876, %v1875
        %v1905 = vpack.c.b16 %v1878, %v1877
        %v1906 = vpack.c.b16 %v1880, %v1879
        %v1907 = vpack.c.b16 %v1882, %v1881
        %v1908 = vpack.c.b16 %v1884, %v1883
        %v1909 = vpack.c.b16 %v1886, %v1885
        %v1910 = vpack.c.b16 %v1888, %v1887
        %v1911 = vpack.c.b16 %v1890, %v1889
        %v1912 = vpack.c.b16 %v1892, %v1891
        %v1913 = vpack.c.b16 %v1894, %v1893
        %v1914 = vpack.c.b16 %v1896, %v1895
        %v1915 = vpack.c.b16 %v1898, %v1897
        %v1916 = vpack.c.b16 %v1900, %v1899
        %1933 = vmatprep.subr.bf16.mxu0 0
        %1934 = vmatpush1.bf16.msra.mxu0 %v1908
        %1935 = vmatprep.subr.bf16.mxu0 0
        %1936 = vmatpush1.bf16.msra.mxu0 %v1907
        %1937 = vmatprep.subr.bf16.mxu0 0
        %1938 = vmatpush1.bf16.msra.mxu0 %v1906
        %1939 = vmatprep.subr.bf16.mxu0 0
        %1940 = vmatpush1.bf16.msra.mxu0 %v1905
        %1941 = vmatprep.subr.bf16.mxu0 0
        %1942 = vmatpush1.bf16.msra.mxu0 %v1904
        %1943 = vmatprep.subr.bf16.mxu0 0
        %1944 = vmatpush1.bf16.msra.mxu0 %v1903
        %1945 = vmatprep.subr.bf16.mxu0 0
        %1946 = vmatpush1.bf16.msra.mxu0 %v1902
        %1947 = vmatprep.subr.bf16.mxu0 0
        %1948 = vmatpush1.bf16.msra.mxu0 %v1901
        %1949 = vmatprep.subr.bf16.mxu0 0
        %1950 = vmatpush2.bf16.msra.mxu0 %v1916
        %1951 = vmatprep.subr.bf16.mxu0 0
        %1952 = vmatpush2.bf16.msra.mxu0 %v1915
        %1953 = vmatprep.subr.bf16.mxu0 0
        %1954 = vmatpush2.bf16.msra.mxu0 %v1914
        %1955 = vmatprep.subr.bf16.mxu0 0
        %1956 = vmatpush2.bf16.msra.mxu0 %v1913
        %1957 = vmatprep.subr.bf16.mxu0 0
        %1958 = vmatpush2.bf16.msra.mxu0 %v1912
        %1959 = vmatprep.subr.bf16.mxu0 0
        %1960 = vmatpush2.bf16.msra.mxu0 %v1911
        %1961 = vmatprep.subr.bf16.mxu0 0
        %1962 = vmatpush2.bf16.msra.mxu0 %v1910
        %1963 = vmatprep.subr.bf16.mxu0 0
        %1964 = vmatpush2.bf16.msra.mxu0 %v1909
        %1965 = vmatprep.mubr.bf16.mxu0 %v1790
        %1966 = vmatmul.mubr.bf16.gmra.mxu0 %v1789
        %v1967 = vpop.f32.mrf.mxu0
        %v1968 = vadd.f32 0.0, %v1967
        %v1969 = vpop.f32.mrf.mxu0
        %v1970 = vpop.f32.mrf.mxu0
        %v1971 = vadd.f32 0.0, %v1970
        %v1972 = vpop.f32.mrf.mxu0
        %1973 = vmatprep.mubr.bf16.mxu0 %v1792
        %1974 = vmatmul.mubr.bf16.gmra.mxu0 %v1791
        %v1975 = vpop.f32.mrf.mxu0
        %v1976 = vadd.f32 0.0, %v1975
        %v1977 = vpop.f32.mrf.mxu0
        %v1978 = vpop.f32.mrf.mxu0
        %v1979 = vadd.f32 0.0, %v1978
        %v1980 = vpop.f32.mrf.mxu0
        %1981 = vmatprep.mubr.bf16.mxu0 %v1794
        %1982 = vmatmul.mubr.bf16.gmra.mxu0 %v1793
        %v1983 = vpop.f32.mrf.mxu0
        %v1984 = vadd.f32 0.0, %v1983
        %v1985 = vpop.f32.mrf.mxu0
        %v1986 = vpop.f32.mrf.mxu0
        %v1987 = vadd.f32 0.0, %v1986
        %v1988 = vpop.f32.mrf.mxu0
        %1989 = vmatprep.mubr.bf16.mxu0 %v1796
        %1990 = vmatmul.mubr.bf16.gmra.mxu0 %v1795
        %v1991 = vpop.f32.mrf.mxu0
        %v1992 = vadd.f32 0.0, %v1991
        %v1993 = vpop.f32.mrf.mxu0
        %v1994 = vpop.f32.mrf.mxu0
        %v1995 = vadd.f32 0.0, %v1994
        %v1996 = vpop.f32.mrf.mxu0
        %1997 = vmatprep.mubr.bf16.mxu0 %v1798
        %1998 = vmatmul.mubr.bf16.gmra.mxu0 %v1797
        %v1999 = vpop.f32.mrf.mxu0
        %v2000 = vadd.f32 0.0, %v1999
        %v2001 = vpop.f32.mrf.mxu0
        %v2002 = vpop.f32.mrf.mxu0
        %v2003 = vadd.f32 0.0, %v2002
        %v2004 = vpop.f32.mrf.mxu0
        %2005 = vmatprep.mubr.bf16.mxu0 %v1800
        %2006 = vmatmul.mubr.bf16.gmra.mxu0 %v1799
        %v2007 = vpop.f32.mrf.mxu0
        %v2008 = vadd.f32 0.0, %v2007
        %v2009 = vpop.f32.mrf.mxu0
        %v2010 = vpop.f32.mrf.mxu0
        %v2011 = vadd.f32 0.0, %v2010
        %v2012 = vpop.f32.mrf.mxu0
        %2013 = vmatprep.mubr.bf16.mxu0 %v1802
        %2014 = vmatmul.mubr.bf16.gmra.mxu0 %v1801
        %v2015 = vpop.f32.mrf.mxu0
        %v2016 = vadd.f32 0.0, %v2015
        %v2017 = vpop.f32.mrf.mxu0
        %v2018 = vpop.f32.mrf.mxu0
        %v2019 = vadd.f32 0.0, %v2018
        %v2020 = vpop.f32.mrf.mxu0
        %2021 = vmatprep.mubr.bf16.mxu0 %v1804
        %2022 = vmatmul.mubr.bf16.gmra.mxu0 %v1803
        %v2023 = vpop.f32.mrf.mxu0
        %v2024 = vadd.f32 0.0, %v2023
        %v2025 = vpop.f32.mrf.mxu0
        %v2026 = vpop.f32.mrf.mxu0
        %v2027 = vadd.f32 0.0, %v2026
        %v2028 = vpop.f32.mrf.mxu0
        %2029 = vdwg.mxu0
        %v2030 = vld [vmem:[%s3 + $0x4] sm:$0xf]
        %v2031 = vld [vmem:[%s3 + $0x14] sm:$0xf]
        %v2032 = vld [vmem:[%s3 + $0x24] sm:$0xf]
        %v2033 = vld [vmem:[%s3 + $0x34] sm:$0xf]
        %v2034 = vld [vmem:[%s3 + $0x44] sm:$0xf]
        %v2035 = vld [vmem:[%s3 + $0x54] sm:$0xf]
        %v2036 = vld [vmem:[%s3 + $0x64] sm:$0xf]
        %v2037 = vld [vmem:[%s3 + $0x74] sm:$0xf]
        %v2038 = vld [vmem:[%s3 + $0x84] sm:$0xf]
        %v2039 = vld [vmem:[%s3 + $0x94] sm:$0xf]
        %v2040 = vld [vmem:[%s3 + $0xa4] sm:$0xf]
        %v2041 = vld [vmem:[%s3 + $0xb4] sm:$0xf]
        %v2042 = vld [vmem:[%s3 + $0xc4] sm:$0xf]
        %v2043 = vld [vmem:[%s3 + $0xd4] sm:$0xf]
        %v2044 = vld [vmem:[%s3 + $0xe4] sm:$0xf]
        %v2045 = vld [vmem:[%s3 + $0xf4] sm:$0xf]
        %v2046 = vld [vmem:[%s3 + $0x104] sm:$0xf]
        %v2047 = vld [vmem:[%s3 + $0x114] sm:$0xf]
        %v2048 = vld [vmem:[%s3 + $0x124] sm:$0xf]
        %v2049 = vld [vmem:[%s3 + $0x134] sm:$0xf]
        %v2050 = vld [vmem:[%s3 + $0x144] sm:$0xf]
        %v2051 = vld [vmem:[%s3 + $0x154] sm:$0xf]
        %v2052 = vld [vmem:[%s3 + $0x164] sm:$0xf]
        %v2053 = vld [vmem:[%s3 + $0x174] sm:$0xf]
        %v2054 = vld [vmem:[%s3 + $0x184] sm:$0xf]
        %v2055 = vld [vmem:[%s3 + $0x194] sm:$0xf]
        %v2056 = vld [vmem:[%s3 + $0x1a4] sm:$0xf]
        %v2057 = vld [vmem:[%s3 + $0x1b4] sm:$0xf]
        %v2058 = vld [vmem:[%s3 + $0x1c4] sm:$0xf]
        %v2059 = vld [vmem:[%s3 + $0x1d4] sm:$0xf]
        %v2060 = vld [vmem:[%s3 + $0x1e4] sm:$0xf]
        %v2061 = vld [vmem:[%s3 + $0x1f4] sm:$0xf]
        %v2094 = vunpack.c.l.b16 %v2030
        %v2095 = vunpack.c.l.b16 %v2031
        %v2096 = vunpack.c.l.b16 %v2032
        %v2097 = vunpack.c.l.b16 %v2033
        %v2098 = vunpack.c.l.b16 %v2034
        %v2099 = vunpack.c.l.b16 %v2035
        %v2100 = vunpack.c.l.b16 %v2036
        %v2101 = vunpack.c.l.b16 %v2037
        %v2102 = vunpack.c.l.b16 %v2038
        %v2103 = vunpack.c.l.b16 %v2039
        %v2104 = vunpack.c.l.b16 %v2040
        %v2105 = vunpack.c.l.b16 %v2041
        %v2106 = vunpack.c.l.b16 %v2042
        %v2107 = vunpack.c.l.b16 %v2043
        %v2108 = vunpack.c.l.b16 %v2044
        %v2109 = vunpack.c.l.b16 %v2045
        %v2110 = vunpack.c.l.b16 %v2046
        %v2111 = vunpack.c.l.b16 %v2047
        %v2112 = vunpack.c.l.b16 %v2048
        %v2113 = vunpack.c.l.b16 %v2049
        %v2114 = vunpack.c.l.b16 %v2050
        %v2115 = vunpack.c.l.b16 %v2051
        %v2116 = vunpack.c.l.b16 %v2052
        %v2117 = vunpack.c.l.b16 %v2053
        %v2118 = vunpack.c.l.b16 %v2054
        %v2119 = vunpack.c.l.b16 %v2055
        %v2120 = vunpack.c.l.b16 %v2056
        %v2121 = vunpack.c.l.b16 %v2057
        %v2122 = vunpack.c.l.b16 %v2058
        %v2123 = vunpack.c.l.b16 %v2059
        %v2124 = vunpack.c.l.b16 %v2060
        %v2125 = vunpack.c.l.b16 %v2061
        %v2126 = vpack.c.b16 %v2095, %v2094
        %v2127 = vpack.c.b16 %v2097, %v2096
        %v2128 = vpack.c.b16 %v2099, %v2098
        %v2129 = vpack.c.b16 %v2101, %v2100
        %v2130 = vpack.c.b16 %v2103, %v2102
        %v2131 = vpack.c.b16 %v2105, %v2104
        %v2132 = vpack.c.b16 %v2107, %v2106
        %v2133 = vpack.c.b16 %v2109, %v2108
        %v2134 = vpack.c.b16 %v2111, %v2110
        %v2135 = vpack.c.b16 %v2113, %v2112
        %v2136 = vpack.c.b16 %v2115, %v2114
        %v2137 = vpack.c.b16 %v2117, %v2116
        %v2138 = vpack.c.b16 %v2119, %v2118
        %v2139 = vpack.c.b16 %v2121, %v2120
        %v2140 = vpack.c.b16 %v2123, %v2122
        %v2141 = vpack.c.b16 %v2125, %v2124
        %2158 = vmatprep.subr.bf16.mxu0 0
        %2159 = vmatpush1.bf16.msra.mxu0 %v2133
        %2160 = vmatprep.subr.bf16.mxu0 0
        %2161 = vmatpush1.bf16.msra.mxu0 %v2132
        %2162 = vmatprep.subr.bf16.mxu0 0
        %2163 = vmatpush1.bf16.msra.mxu0 %v2131
        %2164 = vmatprep.subr.bf16.mxu0 0
        %2165 = vmatpush1.bf16.msra.mxu0 %v2130
        %2166 = vmatprep.subr.bf16.mxu0 0
        %2167 = vmatpush1.bf16.msra.mxu0 %v2129
        %2168 = vmatprep.subr.bf16.mxu0 0
        %2169 = vmatpush1.bf16.msra.mxu0 %v2128
        %2170 = vmatprep.subr.bf16.mxu0 0
        %2171 = vmatpush1.bf16.msra.mxu0 %v2127
        %2172 = vmatprep.subr.bf16.mxu0 0
        %2173 = vmatpush1.bf16.msra.mxu0 %v2126
        %2174 = vmatprep.subr.bf16.mxu0 0
        %2175 = vmatpush2.bf16.msra.mxu0 %v2141
        %2176 = vmatprep.subr.bf16.mxu0 0
        %2177 = vmatpush2.bf16.msra.mxu0 %v2140
        %2178 = vmatprep.subr.bf16.mxu0 0
        %2179 = vmatpush2.bf16.msra.mxu0 %v2139
        %2180 = vmatprep.subr.bf16.mxu0 0
        %2181 = vmatpush2.bf16.msra.mxu0 %v2138
        %2182 = vmatprep.subr.bf16.mxu0 0
        %2183 = vmatpush2.bf16.msra.mxu0 %v2137
        %2184 = vmatprep.subr.bf16.mxu0 0
        %2185 = vmatpush2.bf16.msra.mxu0 %v2136
        %2186 = vmatprep.subr.bf16.mxu0 0
        %2187 = vmatpush2.bf16.msra.mxu0 %v2135
        %2188 = vmatprep.subr.bf16.mxu0 0
        %2189 = vmatpush2.bf16.msra.mxu0 %v2134
        %2190 = vmatprep.mubr.bf16.mxu0 %v1790
        %2191 = vmatmul.mubr.bf16.gmra.mxu0 %v1789
        %v2192 = vpop.f32.mrf.mxu0
        %v2193 = vadd.f32 0.0, %v2192
        %v2194 = vpop.f32.mrf.mxu0
        %v2195 = vpop.f32.mrf.mxu0
        %v2196 = vadd.f32 0.0, %v2195
        %v2197 = vpop.f32.mrf.mxu0
        %2198 = vmatprep.mubr.bf16.mxu0 %v1792
        %2199 = vmatmul.mubr.bf16.gmra.mxu0 %v1791
        %v2200 = vpop.f32.mrf.mxu0
        %v2201 = vadd.f32 0.0, %v2200
        %v2202 = vpop.f32.mrf.mxu0
        %v2203 = vpop.f32.mrf.mxu0
        %v2204 = vadd.f32 0.0, %v2203
        %v2205 = vpop.f32.mrf.mxu0
        %2206 = vmatprep.mubr.bf16.mxu0 %v1794
        %2207 = vmatmul.mubr.bf16.gmra.mxu0 %v1793
        %v2208 = vpop.f32.mrf.mxu0
        %v2209 = vadd.f32 0.0, %v2208
        %v2210 = vpop.f32.mrf.mxu0
        %v2211 = vpop.f32.mrf.mxu0
        %v2212 = vadd.f32 0.0, %v2211
        %v2213 = vpop.f32.mrf.mxu0
        %2214 = vmatprep.mubr.bf16.mxu0 %v1796
        %2215 = vmatmul.mubr.bf16.gmra.mxu0 %v1795
        %v2216 = vpop.f32.mrf.mxu0
        %v2217 = vadd.f32 0.0, %v2216
        %v2218 = vpop.f32.mrf.mxu0
        %v2219 = vpop.f32.mrf.mxu0
        %v2220 = vadd.f32 0.0, %v2219
        %v2221 = vpop.f32.mrf.mxu0
        %2222 = vmatprep.mubr.bf16.mxu0 %v1798
        %2223 = vmatmul.mubr.bf16.gmra.mxu0 %v1797
        %v2224 = vpop.f32.mrf.mxu0
        %v2225 = vadd.f32 0.0, %v2224
        %v2226 = vpop.f32.mrf.mxu0
        %v2227 = vpop.f32.mrf.mxu0
        %v2228 = vadd.f32 0.0, %v2227
        %v2229 = vpop.f32.mrf.mxu0
        %2230 = vmatprep.mubr.bf16.mxu0 %v1800
        %2231 = vmatmul.mubr.bf16.gmra.mxu0 %v1799
        %v2232 = vpop.f32.mrf.mxu0
        %v2233 = vadd.f32 0.0, %v2232
        %v2234 = vpop.f32.mrf.mxu0
        %v2235 = vpop.f32.mrf.mxu0
        %v2236 = vadd.f32 0.0, %v2235
        %v2237 = vpop.f32.mrf.mxu0
        %2238 = vmatprep.mubr.bf16.mxu0 %v1802
        %2239 = vmatmul.mubr.bf16.gmra.mxu0 %v1801
        %v2240 = vpop.f32.mrf.mxu0
        %v2241 = vadd.f32 0.0, %v2240
        %v2242 = vpop.f32.mrf.mxu0
        %v2243 = vpop.f32.mrf.mxu0
        %v2244 = vadd.f32 0.0, %v2243
        %v2245 = vpop.f32.mrf.mxu0
        %2246 = vmatprep.mubr.bf16.mxu0 %v1804
        %2247 = vmatmul.mubr.bf16.gmra.mxu0 %v1803
        %v2248 = vpop.f32.mrf.mxu0
        %v2249 = vadd.f32 0.0, %v2248
        %v2250 = vpop.f32.mrf.mxu0
        %v2251 = vpop.f32.mrf.mxu0
        %v2252 = vadd.f32 0.0, %v2251
        %v2253 = vpop.f32.mrf.mxu0
        %2254 = vdwg.mxu0
        %v2255 = vmax.f32 %v1968, %v2193
        %v2256 = vmax.f32 %v1971, %v2196
        %v2257 = vmax.f32 %v1976, %v2201
        %v2258 = vmax.f32 %v1979, %v2204
        %v2259 = vmax.f32 %v1984, %v2209
        %v2260 = vmax.f32 %v1987, %v2212
        %v2261 = vmax.f32 %v1992, %v2217
        %v2262 = vmax.f32 %v1995, %v2220
        %v2263 = vmax.f32 %v2000, %v2225
        %v2264 = vmax.f32 %v2003, %v2228
        %v2265 = vmax.f32 %v2008, %v2233
        %v2266 = vmax.f32 %v2011, %v2236
        %v2267 = vmax.f32 %v2016, %v2241
        %v2268 = vmax.f32 %v2019, %v2244
        %v2269 = vmax.f32 %v2024, %v2249
        %v2270 = vmax.f32 %v2027, %v2252
        %v2271 = vld [vmem:[%s3 + $0x8] sm:$0xf]
        %v2272 = vld [vmem:[%s3 + $0x18] sm:$0xf]
        %v2273 = vld [vmem:[%s3 + $0x28] sm:$0xf]
        %v2274 = vld [vmem:[%s3 + $0x38] sm:$0xf]
        %v2275 = vld [vmem:[%s3 + $0x48] sm:$0xf]
        %v2276 = vld [vmem:[%s3 + $0x58] sm:$0xf]
        %v2277 = vld [vmem:[%s3 + $0x68] sm:$0xf]
        %v2278 = vld [vmem:[%s3 + $0x78] sm:$0xf]
        %v2279 = vld [vmem:[%s3 + $0x88] sm:$0xf]
        %v2280 = vld [vmem:[%s3 + $0x98] sm:$0xf]
        %v2281 = vld [vmem:[%s3 + $0xa8] sm:$0xf]
        %v2282 = vld [vmem:[%s3 + $0xb8] sm:$0xf]
        %v2283 = vld [vmem:[%s3 + $0xc8] sm:$0xf]
        %v2284 = vld [vmem:[%s3 + $0xd8] sm:$0xf]
        %v2285 = vld [vmem:[%s3 + $0xe8] sm:$0xf]
        %v2286 = vld [vmem:[%s3 + $0xf8] sm:$0xf]
        %v2287 = vld [vmem:[%s3 + $0x108] sm:$0xf]
        %v2288 = vld [vmem:[%s3 + $0x118] sm:$0xf]
        %v2289 = vld [vmem:[%s3 + $0x128] sm:$0xf]
        %v2290 = vld [vmem:[%s3 + $0x138] sm:$0xf]
        %v2291 = vld [vmem:[%s3 + $0x148] sm:$0xf]
        %v2292 = vld [vmem:[%s3 + $0x158] sm:$0xf]
        %v2293 = vld [vmem:[%s3 + $0x168] sm:$0xf]
        %v2294 = vld [vmem:[%s3 + $0x178] sm:$0xf]
        %v2295 = vld [vmem:[%s3 + $0x188] sm:$0xf]
        %v2296 = vld [vmem:[%s3 + $0x198] sm:$0xf]
        %v2297 = vld [vmem:[%s3 + $0x1a8] sm:$0xf]
        %v2298 = vld [vmem:[%s3 + $0x1b8] sm:$0xf]
        %v2299 = vld [vmem:[%s3 + $0x1c8] sm:$0xf]
        %v2300 = vld [vmem:[%s3 + $0x1d8] sm:$0xf]
        %v2301 = vld [vmem:[%s3 + $0x1e8] sm:$0xf]
        %v2302 = vld [vmem:[%s3 + $0x1f8] sm:$0xf]
        %v2335 = vunpack.c.l.b16 %v2271
        %v2336 = vunpack.c.l.b16 %v2272
        %v2337 = vunpack.c.l.b16 %v2273
        %v2338 = vunpack.c.l.b16 %v2274
        %v2339 = vunpack.c.l.b16 %v2275
        %v2340 = vunpack.c.l.b16 %v2276
        %v2341 = vunpack.c.l.b16 %v2277
        %v2342 = vunpack.c.l.b16 %v2278
        %v2343 = vunpack.c.l.b16 %v2279
        %v2344 = vunpack.c.l.b16 %v2280
        %v2345 = vunpack.c.l.b16 %v2281
        %v2346 = vunpack.c.l.b16 %v2282
        %v2347 = vunpack.c.l.b16 %v2283
        %v2348 = vunpack.c.l.b16 %v2284
        %v2349 = vunpack.c.l.b16 %v2285
        %v2350 = vunpack.c.l.b16 %v2286
        %v2351 = vunpack.c.l.b16 %v2287
        %v2352 = vunpack.c.l.b16 %v2288
        %v2353 = vunpack.c.l.b16 %v2289
        %v2354 = vunpack.c.l.b16 %v2290
        %v2355 = vunpack.c.l.b16 %v2291
        %v2356 = vunpack.c.l.b16 %v2292
        %v2357 = vunpack.c.l.b16 %v2293
        %v2358 = vunpack.c.l.b16 %v2294
        %v2359 = vunpack.c.l.b16 %v2295
        %v2360 = vunpack.c.l.b16 %v2296
        %v2361 = vunpack.c.l.b16 %v2297
        %v2362 = vunpack.c.l.b16 %v2298
        %v2363 = vunpack.c.l.b16 %v2299
        %v2364 = vunpack.c.l.b16 %v2300
        %v2365 = vunpack.c.l.b16 %v2301
        %v2366 = vunpack.c.l.b16 %v2302
        %v2367 = vpack.c.b16 %v2336, %v2335
        %v2368 = vpack.c.b16 %v2338, %v2337
        %v2369 = vpack.c.b16 %v2340, %v2339
        %v2370 = vpack.c.b16 %v2342, %v2341
        %v2371 = vpack.c.b16 %v2344, %v2343
        %v2372 = vpack.c.b16 %v2346, %v2345
        %v2373 = vpack.c.b16 %v2348, %v2347
        %v2374 = vpack.c.b16 %v2350, %v2349
        %v2375 = vpack.c.b16 %v2352, %v2351
        %v2376 = vpack.c.b16 %v2354, %v2353
        %v2377 = vpack.c.b16 %v2356, %v2355
        %v2378 = vpack.c.b16 %v2358, %v2357
        %v2379 = vpack.c.b16 %v2360, %v2359
        %v2380 = vpack.c.b16 %v2362, %v2361
        %v2381 = vpack.c.b16 %v2364, %v2363
        %v2382 = vpack.c.b16 %v2366, %v2365
        %2399 = vmatprep.subr.bf16.mxu0 0
        %2400 = vmatpush1.bf16.msra.mxu0 %v2374
        %2401 = vmatprep.subr.bf16.mxu0 0
        %2402 = vmatpush1.bf16.msra.mxu0 %v2373
        %2403 = vmatprep.subr.bf16.mxu0 0
        %2404 = vmatpush1.bf16.msra.mxu0 %v2372
        %2405 = vmatprep.subr.bf16.mxu0 0
        %2406 = vmatpush1.bf16.msra.mxu0 %v2371
        %2407 = vmatprep.subr.bf16.mxu0 0
        %2408 = vmatpush1.bf16.msra.mxu0 %v2370
        %2409 = vmatprep.subr.bf16.mxu0 0
        %2410 = vmatpush1.bf16.msra.mxu0 %v2369
        %2411 = vmatprep.subr.bf16.mxu0 0
        %2412 = vmatpush1.bf16.msra.mxu0 %v2368
        %2413 = vmatprep.subr.bf16.mxu0 0
        %2414 = vmatpush1.bf16.msra.mxu0 %v2367
        %2415 = vmatprep.subr.bf16.mxu0 0
        %2416 = vmatpush2.bf16.msra.mxu0 %v2382
        %2417 = vmatprep.subr.bf16.mxu0 0
        %2418 = vmatpush2.bf16.msra.mxu0 %v2381
        %2419 = vmatprep.subr.bf16.mxu0 0
        %2420 = vmatpush2.bf16.msra.mxu0 %v2380
        %2421 = vmatprep.subr.bf16.mxu0 0
        %2422 = vmatpush2.bf16.msra.mxu0 %v2379
        %2423 = vmatprep.subr.bf16.mxu0 0
        %2424 = vmatpush2.bf16.msra.mxu0 %v2378
        %2425 = vmatprep.subr.bf16.mxu0 0
        %2426 = vmatpush2.bf16.msra.mxu0 %v2377
        %2427 = vmatprep.subr.bf16.mxu0 0
        %2428 = vmatpush2.bf16.msra.mxu0 %v2376
        %2429 = vmatprep.subr.bf16.mxu0 0
        %2430 = vmatpush2.bf16.msra.mxu0 %v2375
        %2431 = vmatprep.mubr.bf16.mxu0 %v1790
        %2432 = vmatmul.mubr.bf16.gmra.mxu0 %v1789
        %v2433 = vpop.f32.mrf.mxu0
        %v2434 = vadd.f32 0.0, %v2433
        %v2435 = vpop.f32.mrf.mxu0
        %v2436 = vpop.f32.mrf.mxu0
        %v2437 = vadd.f32 0.0, %v2436
        %v2438 = vpop.f32.mrf.mxu0
        %2439 = vmatprep.mubr.bf16.mxu0 %v1792
        %2440 = vmatmul.mubr.bf16.gmra.mxu0 %v1791
        %v2441 = vpop.f32.mrf.mxu0
        %v2442 = vadd.f32 0.0, %v2441
        %v2443 = vpop.f32.mrf.mxu0
        %v2444 = vpop.f32.mrf.mxu0
        %v2445 = vadd.f32 0.0, %v2444
        %v2446 = vpop.f32.mrf.mxu0
        %2447 = vmatprep.mubr.bf16.mxu0 %v1794
        %2448 = vmatmul.mubr.bf16.gmra.mxu0 %v1793
        %v2449 = vpop.f32.mrf.mxu0
        %v2450 = vadd.f32 0.0, %v2449
        %v2451 = vpop.f32.mrf.mxu0
        %v2452 = vpop.f32.mrf.mxu0
        %v2453 = vadd.f32 0.0, %v2452
        %v2454 = vpop.f32.mrf.mxu0
        %2455 = vmatprep.mubr.bf16.mxu0 %v1796
        %2456 = vmatmul.mubr.bf16.gmra.mxu0 %v1795
        %v2457 = vpop.f32.mrf.mxu0
        %v2458 = vadd.f32 0.0, %v2457
        %v2459 = vpop.f32.mrf.mxu0
        %v2460 = vpop.f32.mrf.mxu0
        %v2461 = vadd.f32 0.0, %v2460
        %v2462 = vpop.f32.mrf.mxu0
        %2463 = vmatprep.mubr.bf16.mxu0 %v1798
        %2464 = vmatmul.mubr.bf16.gmra.mxu0 %v1797
        %v2465 = vpop.f32.mrf.mxu0
        %v2466 = vadd.f32 0.0, %v2465
        %v2467 = vpop.f32.mrf.mxu0
        %v2468 = vpop.f32.mrf.mxu0
        %v2469 = vadd.f32 0.0, %v2468
        %v2470 = vpop.f32.mrf.mxu0
        %2471 = vmatprep.mubr.bf16.mxu0 %v1800
        %2472 = vmatmul.mubr.bf16.gmra.mxu0 %v1799
        %v2473 = vpop.f32.mrf.mxu0
        %v2474 = vadd.f32 0.0, %v2473
        %v2475 = vpop.f32.mrf.mxu0
        %v2476 = vpop.f32.mrf.mxu0
        %v2477 = vadd.f32 0.0, %v2476
        %v2478 = vpop.f32.mrf.mxu0
        %2479 = vmatprep.mubr.bf16.mxu0 %v1802
        %2480 = vmatmul.mubr.bf16.gmra.mxu0 %v1801
        %v2481 = vpop.f32.mrf.mxu0
        %v2482 = vadd.f32 0.0, %v2481
        %v2483 = vpop.f32.mrf.mxu0
        %v2484 = vpop.f32.mrf.mxu0
        %v2485 = vadd.f32 0.0, %v2484
        %v2486 = vpop.f32.mrf.mxu0
        %2487 = vmatprep.mubr.bf16.mxu0 %v1804
        %2488 = vmatmul.mubr.bf16.gmra.mxu0 %v1803
        %v2489 = vpop.f32.mrf.mxu0
        %v2490 = vadd.f32 0.0, %v2489
        %v2491 = vpop.f32.mrf.mxu0
        %v2492 = vpop.f32.mrf.mxu0
        %v2493 = vadd.f32 0.0, %v2492
        %v2494 = vpop.f32.mrf.mxu0
        %2495 = vdwg.mxu0
        %v2496 = vmax.f32 %v2255, %v2434
        %v2497 = vmax.f32 %v2256, %v2437
        %v2498 = vmax.f32 %v2257, %v2442
        %v2499 = vmax.f32 %v2258, %v2445
        %v2500 = vmax.f32 %v2259, %v2450
        %v2501 = vmax.f32 %v2260, %v2453
        %v2502 = vmax.f32 %v2261, %v2458
        %v2503 = vmax.f32 %v2262, %v2461
        %v2504 = vmax.f32 %v2263, %v2466
        %v2505 = vmax.f32 %v2264, %v2469
        %v2506 = vmax.f32 %v2265, %v2474
        %v2507 = vmax.f32 %v2266, %v2477
        %v2508 = vmax.f32 %v2267, %v2482
        %v2509 = vmax.f32 %v2268, %v2485
        %v2510 = vmax.f32 %v2269, %v2490
        %v2511 = vmax.f32 %v2270, %v2493
        %v2512 = vld [vmem:[%s3 + $0xc] sm:$0xf]
        %v2513 = vld [vmem:[%s3 + $0x1c] sm:$0xf]
        %v2514 = vld [vmem:[%s3 + $0x2c] sm:$0xf]
        %v2515 = vld [vmem:[%s3 + $0x3c] sm:$0xf]
        %v2516 = vld [vmem:[%s3 + $0x4c] sm:$0xf]
        %v2517 = vld [vmem:[%s3 + $0x5c] sm:$0xf]
        %v2518 = vld [vmem:[%s3 + $0x6c] sm:$0xf]
        %v2519 = vld [vmem:[%s3 + $0x7c] sm:$0xf]
        %v2520 = vld [vmem:[%s3 + $0x8c] sm:$0xf]
        %v2521 = vld [vmem:[%s3 + $0x9c] sm:$0xf]
        %v2522 = vld [vmem:[%s3 + $0xac] sm:$0xf]
        %v2523 = vld [vmem:[%s3 + $0xbc] sm:$0xf]
        %v2524 = vld [vmem:[%s3 + $0xcc] sm:$0xf]
        %v2525 = vld [vmem:[%s3 + $0xdc] sm:$0xf]
        %v2526 = vld [vmem:[%s3 + $0xec] sm:$0xf]
        %v2527 = vld [vmem:[%s3 + $0xfc] sm:$0xf]
        %v2528 = vld [vmem:[%s3 + $0x10c] sm:$0xf]
        %v2529 = vld [vmem:[%s3 + $0x11c] sm:$0xf]
        %v2530 = vld [vmem:[%s3 + $0x12c] sm:$0xf]
        %v2531 = vld [vmem:[%s3 + $0x13c] sm:$0xf]
        %v2532 = vld [vmem:[%s3 + $0x14c] sm:$0xf]
        %v2533 = vld [vmem:[%s3 + $0x15c] sm:$0xf]
        %v2534 = vld [vmem:[%s3 + $0x16c] sm:$0xf]
        %v2535 = vld [vmem:[%s3 + $0x17c] sm:$0xf]
        %v2536 = vld [vmem:[%s3 + $0x18c] sm:$0xf]
        %v2537 = vld [vmem:[%s3 + $0x19c] sm:$0xf]
        %v2538 = vld [vmem:[%s3 + $0x1ac] sm:$0xf]
        %v2539 = vld [vmem:[%s3 + $0x1bc] sm:$0xf]
        %v2540 = vld [vmem:[%s3 + $0x1cc] sm:$0xf]
        %v2541 = vld [vmem:[%s3 + $0x1dc] sm:$0xf]
        %v2542 = vld [vmem:[%s3 + $0x1ec] sm:$0xf]
        %v2543 = vld [vmem:[%s3 + $0x1fc] sm:$0xf]
        %v2576 = vunpack.c.l.b16 %v2512
        %v2577 = vunpack.c.l.b16 %v2513
        %v2578 = vunpack.c.l.b16 %v2514
        %v2579 = vunpack.c.l.b16 %v2515
        %v2580 = vunpack.c.l.b16 %v2516
        %v2581 = vunpack.c.l.b16 %v2517
        %v2582 = vunpack.c.l.b16 %v2518
        %v2583 = vunpack.c.l.b16 %v2519
        %v2584 = vunpack.c.l.b16 %v2520
        %v2585 = vunpack.c.l.b16 %v2521
        %v2586 = vunpack.c.l.b16 %v2522
        %v2587 = vunpack.c.l.b16 %v2523
        %v2588 = vunpack.c.l.b16 %v2524
        %v2589 = vunpack.c.l.b16 %v2525
        %v2590 = vunpack.c.l.b16 %v2526
        %v2591 = vunpack.c.l.b16 %v2527
        %v2592 = vunpack.c.l.b16 %v2528
        %v2593 = vunpack.c.l.b16 %v2529
        %v2594 = vunpack.c.l.b16 %v2530
        %v2595 = vunpack.c.l.b16 %v2531
        %v2596 = vunpack.c.l.b16 %v2532
        %v2597 = vunpack.c.l.b16 %v2533
        %v2598 = vunpack.c.l.b16 %v2534
        %v2599 = vunpack.c.l.b16 %v2535
        %v2600 = vunpack.c.l.b16 %v2536
        %v2601 = vunpack.c.l.b16 %v2537
        %v2602 = vunpack.c.l.b16 %v2538
        %v2603 = vunpack.c.l.b16 %v2539
        %v2604 = vunpack.c.l.b16 %v2540
        %v2605 = vunpack.c.l.b16 %v2541
        %v2606 = vunpack.c.l.b16 %v2542
        %v2607 = vunpack.c.l.b16 %v2543
        %v2608 = vpack.c.b16 %v2577, %v2576
        %v2609 = vpack.c.b16 %v2579, %v2578
        %v2610 = vpack.c.b16 %v2581, %v2580
        %v2611 = vpack.c.b16 %v2583, %v2582
        %v2612 = vpack.c.b16 %v2585, %v2584
        %v2613 = vpack.c.b16 %v2587, %v2586
        %v2614 = vpack.c.b16 %v2589, %v2588
        %v2615 = vpack.c.b16 %v2591, %v2590
        %v2616 = vpack.c.b16 %v2593, %v2592
        %v2617 = vpack.c.b16 %v2595, %v2594
        %v2618 = vpack.c.b16 %v2597, %v2596
        %v2619 = vpack.c.b16 %v2599, %v2598
        %v2620 = vpack.c.b16 %v2601, %v2600
        %v2621 = vpack.c.b16 %v2603, %v2602
        %v2622 = vpack.c.b16 %v2605, %v2604
        %v2623 = vpack.c.b16 %v2607, %v2606
        %2640 = vmatprep.subr.bf16.mxu0 0
        %2641 = vmatpush1.bf16.msra.mxu0 %v2615
        %2642 = vmatprep.subr.bf16.mxu0 0
        %2643 = vmatpush1.bf16.msra.mxu0 %v2614
        %2644 = vmatprep.subr.bf16.mxu0 0
        %2645 = vmatpush1.bf16.msra.mxu0 %v2613
        %2646 = vmatprep.subr.bf16.mxu0 0
        %2647 = vmatpush1.bf16.msra.mxu0 %v2612
        %2648 = vmatprep.subr.bf16.mxu0 0
        %2649 = vmatpush1.bf16.msra.mxu0 %v2611
        %2650 = vmatprep.subr.bf16.mxu0 0
        %2651 = vmatpush1.bf16.msra.mxu0 %v2610
        %2652 = vmatprep.subr.bf16.mxu0 0
        %2653 = vmatpush1.bf16.msra.mxu0 %v2609
        %2654 = vmatprep.subr.bf16.mxu0 0
        %2655 = vmatpush1.bf16.msra.mxu0 %v2608
        %2656 = vmatprep.subr.bf16.mxu0 0
        %2657 = vmatpush2.bf16.msra.mxu0 %v2623
        %2658 = vmatprep.subr.bf16.mxu0 0
        %2659 = vmatpush2.bf16.msra.mxu0 %v2622
        %2660 = vmatprep.subr.bf16.mxu0 0
        %2661 = vmatpush2.bf16.msra.mxu0 %v2621
        %2662 = vmatprep.subr.bf16.mxu0 0
        %2663 = vmatpush2.bf16.msra.mxu0 %v2620
        %2664 = vmatprep.subr.bf16.mxu0 0
        %2665 = vmatpush2.bf16.msra.mxu0 %v2619
        %2666 = vmatprep.subr.bf16.mxu0 0
        %2667 = vmatpush2.bf16.msra.mxu0 %v2618
        %2668 = vmatprep.subr.bf16.mxu0 0
        %2669 = vmatpush2.bf16.msra.mxu0 %v2617
        %2670 = vmatprep.subr.bf16.mxu0 0
        %2671 = vmatpush2.bf16.msra.mxu0 %v2616
        %2672 = vmatprep.mubr.bf16.mxu0 %v1790
        %2673 = vmatmul.mubr.bf16.gmra.mxu0 %v1789
        %v2674 = vpop.f32.mrf.mxu0
        %v2675 = vadd.f32 0.0, %v2674
        %v2676 = vpop.f32.mrf.mxu0
        %v2677 = vpop.f32.mrf.mxu0
        %v2678 = vadd.f32 0.0, %v2677
        %v2679 = vpop.f32.mrf.mxu0
        %2680 = vmatprep.mubr.bf16.mxu0 %v1792
        %2681 = vmatmul.mubr.bf16.gmra.mxu0 %v1791
        %v2682 = vpop.f32.mrf.mxu0
        %v2683 = vadd.f32 0.0, %v2682
        %v2684 = vpop.f32.mrf.mxu0
        %v2685 = vpop.f32.mrf.mxu0
        %v2686 = vadd.f32 0.0, %v2685
        %v2687 = vpop.f32.mrf.mxu0
        %2688 = vmatprep.mubr.bf16.mxu0 %v1794
        %2689 = vmatmul.mubr.bf16.gmra.mxu0 %v1793
        %v2690 = vpop.f32.mrf.mxu0
        %v2691 = vadd.f32 0.0, %v2690
        %v2692 = vpop.f32.mrf.mxu0
        %v2693 = vpop.f32.mrf.mxu0
        %v2694 = vadd.f32 0.0, %v2693
        %v2695 = vpop.f32.mrf.mxu0
        %2696 = vmatprep.mubr.bf16.mxu0 %v1796
        %2697 = vmatmul.mubr.bf16.gmra.mxu0 %v1795
        %v2698 = vpop.f32.mrf.mxu0
        %v2699 = vadd.f32 0.0, %v2698
        %v2700 = vpop.f32.mrf.mxu0
        %v2701 = vpop.f32.mrf.mxu0
        %v2702 = vadd.f32 0.0, %v2701
        %v2703 = vpop.f32.mrf.mxu0
        %2704 = vmatprep.mubr.bf16.mxu0 %v1798
        %2705 = vmatmul.mubr.bf16.gmra.mxu0 %v1797
        %v2706 = vpop.f32.mrf.mxu0
        %v2707 = vadd.f32 0.0, %v2706
        %v2708 = vpop.f32.mrf.mxu0
        %v2709 = vpop.f32.mrf.mxu0
        %v2710 = vadd.f32 0.0, %v2709
        %v2711 = vpop.f32.mrf.mxu0
        %2712 = vmatprep.mubr.bf16.mxu0 %v1800
        %2713 = vmatmul.mubr.bf16.gmra.mxu0 %v1799
        %v2714 = vpop.f32.mrf.mxu0
        %v2715 = vadd.f32 0.0, %v2714
        %v2716 = vpop.f32.mrf.mxu0
        %v2717 = vpop.f32.mrf.mxu0
        %v2718 = vadd.f32 0.0, %v2717
        %v2719 = vpop.f32.mrf.mxu0
        %2720 = vmatprep.mubr.bf16.mxu0 %v1802
        %2721 = vmatmul.mubr.bf16.gmra.mxu0 %v1801
        %v2722 = vpop.f32.mrf.mxu0
        %v2723 = vadd.f32 0.0, %v2722
        %v2724 = vpop.f32.mrf.mxu0
        %v2725 = vpop.f32.mrf.mxu0
        %v2726 = vadd.f32 0.0, %v2725
        %v2727 = vpop.f32.mrf.mxu0
        %2728 = vmatprep.mubr.bf16.mxu0 %v1804
        %2729 = vmatmul.mubr.bf16.gmra.mxu0 %v1803
        %v2730 = vpop.f32.mrf.mxu0
        %v2731 = vadd.f32 0.0, %v2730
        %v2732 = vpop.f32.mrf.mxu0
        %v2733 = vpop.f32.mrf.mxu0
        %v2734 = vadd.f32 0.0, %v2733
        %v2735 = vpop.f32.mrf.mxu0
        %2736 = vdwg.mxu0
        %v2737 = vmax.f32 %v2496, %v2675
        %v2738 = vmax.f32 %v2497, %v2678
        %v2739 = vmax.f32 %v2498, %v2683
        %v2740 = vmax.f32 %v2499, %v2686
        %v2741 = vmax.f32 %v2500, %v2691
        %v2742 = vmax.f32 %v2501, %v2694
        %v2743 = vmax.f32 %v2502, %v2699
        %v2744 = vmax.f32 %v2503, %v2702
        %v2745 = vmax.f32 %v2504, %v2707
        %v2746 = vmax.f32 %v2505, %v2710
        %v2747 = vmax.f32 %v2506, %v2715
        %v2748 = vmax.f32 %v2507, %v2718
        %v2749 = vmax.f32 %v2508, %v2723
        %v2750 = vmax.f32 %v2509, %v2726
        %v2751 = vmax.f32 %v2510, %v2731
        %v2752 = vmax.f32 %v2511, %v2734
        %v2753 = vld [vmem:[%s4] sm:$0x1]
        %v2755 = vlaneseq
        %v2756 = vshrl.u32 %v2755, 7
        %v2757 = vsub.s32 0, %v2756
        %v2758 = vrot.slane %v2753, %v2757
        %v2760 = vadd.f32 %v2737, %v2758
        %v2761 = vadd.f32 %v2738, %v2758
        %v2762 = vadd.f32 %v2739, %v2758
        %v2763 = vadd.f32 %v2740, %v2758
        %v2764 = vadd.f32 %v2741, %v2758
        %v2765 = vadd.f32 %v2742, %v2758
        %v2766 = vadd.f32 %v2743, %v2758
        %v2767 = vadd.f32 %v2744, %v2758
        %v2768 = vadd.f32 %v2745, %v2758
        %v2769 = vadd.f32 %v2746, %v2758
        %v2770 = vadd.f32 %v2747, %v2758
        %v2771 = vadd.f32 %v2748, %v2758
        %v2772 = vadd.f32 %v2749, %v2758
        %v2773 = vadd.f32 %v2750, %v2758
        %v2774 = vadd.f32 %v2751, %v2758
        %v2775 = vadd.f32 %v2752, %v2758
        %v2776 = vmax.f32 %v2760, 0.0
        %v2777 = vmax.f32 %v2761, 0.0
        %v2778 = vmax.f32 %v2762, 0.0
        %v2779 = vmax.f32 %v2763, 0.0
        %v2780 = vmax.f32 %v2764, 0.0
        %v2781 = vmax.f32 %v2765, 0.0
        %v2782 = vmax.f32 %v2766, 0.0
        %v2783 = vmax.f32 %v2767, 0.0
        %v2784 = vmax.f32 %v2768, 0.0
        %v2785 = vmax.f32 %v2769, 0.0
        %v2786 = vmax.f32 %v2770, 0.0
        %v2787 = vmax.f32 %v2771, 0.0
        %v2788 = vmax.f32 %v2772, 0.0
        %v2789 = vmax.f32 %v2773, 0.0
        %v2790 = vmax.f32 %v2774, 0.0
        %v2791 = vmax.f32 %v2775, 0.0
        %v2792 = vpack.c.bf16 %v2777, %v2776
        %v2793 = vpack.c.bf16 %v2779, %v2778
        %v2794 = vpack.c.bf16 %v2781, %v2780
        %v2795 = vpack.c.bf16 %v2783, %v2782
        %v2796 = vpack.c.bf16 %v2785, %v2784
        %v2797 = vpack.c.bf16 %v2787, %v2786
        %v2798 = vpack.c.bf16 %v2789, %v2788
        %v2799 = vpack.c.bf16 %v2791, %v2790
        %v2800 = vld [vmem:[#allocation2] sm:$0xf]
        %v2801 = vld [vmem:[#allocation2 + $0x4] sm:$0xf]
        %v2802 = vld [vmem:[#allocation2 + $0x8] sm:$0xf]
        %v2803 = vld [vmem:[#allocation2 + $0xc] sm:$0xf]
        %v2804 = vld [vmem:[#allocation2 + $0x10] sm:$0xf]
        %v2805 = vld [vmem:[#allocation2 + $0x14] sm:$0xf]
        %v2806 = vld [vmem:[#allocation2 + $0x18] sm:$0xf]
        %v2807 = vld [vmem:[#allocation2 + $0x1c] sm:$0xf]
        %v2808 = vld [vmem:[#allocation2 + $0x20] sm:$0xf]
        %v2809 = vld [vmem:[#allocation2 + $0x24] sm:$0xf]
        %v2810 = vld [vmem:[#allocation2 + $0x28] sm:$0xf]
        %v2811 = vld [vmem:[#allocation2 + $0x2c] sm:$0xf]
        %v2812 = vld [vmem:[#allocation2 + $0x30] sm:$0xf]
        %v2813 = vld [vmem:[#allocation2 + $0x34] sm:$0xf]
        %v2814 = vld [vmem:[#allocation2 + $0x38] sm:$0xf]
        %v2815 = vld [vmem:[#allocation2 + $0x3c] sm:$0xf]
        %v2816 = vld [vmem:[%s6] sm:$0x1]
        %v2818 = vlaneseq
        %v2819 = vshrl.u32 %v2818, 7
        %v2820 = vsub.s32 0, %v2819
        %v2821 = vrot.slane %v2816, %v2820
        %v2839 = vunpack.c.l.b16 %v2800
        %v2840 = vunpack.c.l.b16 %v2801
        %v2841 = vunpack.c.l.b16 %v2802
        %v2842 = vunpack.c.l.b16 %v2803
        %v2843 = vunpack.c.l.b16 %v2804
        %v2844 = vunpack.c.l.b16 %v2805
        %v2845 = vunpack.c.l.b16 %v2806
        %v2846 = vunpack.c.l.b16 %v2807
        %v2847 = vunpack.c.l.b16 %v2808
        %v2848 = vunpack.c.l.b16 %v2809
        %v2849 = vunpack.c.l.b16 %v2810
        %v2850 = vunpack.c.l.b16 %v2811
        %v2851 = vunpack.c.l.b16 %v2812
        %v2852 = vunpack.c.l.b16 %v2813
        %v2853 = vunpack.c.l.b16 %v2814
        %v2854 = vunpack.c.l.b16 %v2815
        %v2855 = vpack.c.b16 %v2840, %v2839
        %v2856 = vpack.c.b16 %v2842, %v2841
        %v2857 = vpack.c.b16 %v2844, %v2843
        %v2858 = vpack.c.b16 %v2846, %v2845
        %v2859 = vpack.c.b16 %v2848, %v2847
        %v2860 = vpack.c.b16 %v2850, %v2849
        %v2861 = vpack.c.b16 %v2852, %v2851
        %v2862 = vpack.c.b16 %v2854, %v2853
        %2871 = vmatprep.subr.bf16.mxu0 0
        %2872 = vmatpush1.bf16.msra.mxu0 %v2862
        %2873 = vmatprep.subr.bf16.mxu0 0
        %2874 = vmatpush1.bf16.msra.mxu0 %v2861
        %2875 = vmatprep.subr.bf16.mxu0 0
        %2876 = vmatpush1.bf16.msra.mxu0 %v2860
        %2877 = vmatprep.subr.bf16.mxu0 0
        %2878 = vmatpush1.bf16.msra.mxu0 %v2859
        %2879 = vmatprep.subr.bf16.mxu0 0
        %2880 = vmatpush1.bf16.msra.mxu0 %v2858
        %2881 = vmatprep.subr.bf16.mxu0 0
        %2882 = vmatpush1.bf16.msra.mxu0 %v2857
        %2883 = vmatprep.subr.bf16.mxu0 0
        %2884 = vmatpush1.bf16.msra.mxu0 %v2856
        %2885 = vmatprep.subr.bf16.mxu0 0
        %2886 = vmatpush1.bf16.msra.mxu0 %v2855
        %2887 = vmatprep.subr.bf16.mxu0 0
        %2888 = vmatpush2.bf16.msra.mxu0 0
        %2889 = vmatprep.subr.bf16.mxu0 0
        %2890 = vmatpush2.bf16.msra.mxu0 0
        %2891 = vmatprep.subr.bf16.mxu0 0
        %2892 = vmatpush2.bf16.msra.mxu0 0
        %2893 = vmatprep.subr.bf16.mxu0 0
        %2894 = vmatpush2.bf16.msra.mxu0 0
        %2895 = vmatprep.subr.bf16.mxu0 0
        %2896 = vmatpush2.bf16.msra.mxu0 0
        %2897 = vmatprep.subr.bf16.mxu0 0
        %2898 = vmatpush2.bf16.msra.mxu0 0
        %2899 = vmatprep.subr.bf16.mxu0 0
        %2900 = vmatpush2.bf16.msra.mxu0 0
        %2901 = vmatprep.subr.bf16.mxu0 0
        %2902 = vmatpush2.bf16.msra.mxu0 0
        %2903 = vmatprep.mubr.bf16.mxu0 0
        %2904 = vmatmul.mubr.bf16.gmra.mxu0 %v2792
        %v2905 = vpop.f32.mrf.mxu0
        %v2906 = vadd.f32 %v2821, %v2905
        %v2907 = vpop.f32.mrf.mxu0
        %v2908 = vpop.f32.mrf.mxu0
        %v2909 = vadd.f32 %v2821, %v2908
        %v2910 = vpop.f32.mrf.mxu0
        %2911 = vmatprep.mubr.bf16.mxu0 0
        %2912 = vmatmul.mubr.bf16.gmra.mxu0 %v2793
        %v2913 = vpop.f32.mrf.mxu0
        %v2914 = vadd.f32 %v2821, %v2913
        %v2915 = vpop.f32.mrf.mxu0
        %v2916 = vpop.f32.mrf.mxu0
        %v2917 = vadd.f32 %v2821, %v2916
        %v2918 = vpop.f32.mrf.mxu0
        %2919 = vmatprep.mubr.bf16.mxu0 0
        %2920 = vmatmul.mubr.bf16.gmra.mxu0 %v2794
        %v2921 = vpop.f32.mrf.mxu0
        %v2922 = vadd.f32 %v2821, %v2921
        %v2923 = vpop.f32.mrf.mxu0
        %v2924 = vpop.f32.mrf.mxu0
        %v2925 = vadd.f32 %v2821, %v2924
        %v2926 = vpop.f32.mrf.mxu0
        %2927 = vmatprep.mubr.bf16.mxu0 0
        %2928 = vmatmul.mubr.bf16.gmra.mxu0 %v2795
        %v2929 = vpop.f32.mrf.mxu0
        %v2930 = vadd.f32 %v2821, %v2929
        %v2931 = vpop.f32.mrf.mxu0
        %v2932 = vpop.f32.mrf.mxu0
        %v2933 = vadd.f32 %v2821, %v2932
        %v2934 = vpop.f32.mrf.mxu0
        %2935 = vmatprep.mubr.bf16.mxu0 0
        %2936 = vmatmul.mubr.bf16.gmra.mxu0 %v2796
        %v2937 = vpop.f32.mrf.mxu0
        %v2938 = vadd.f32 %v2821, %v2937
        %v2939 = vpop.f32.mrf.mxu0
        %v2940 = vpop.f32.mrf.mxu0
        %v2941 = vadd.f32 %v2821, %v2940
        %v2942 = vpop.f32.mrf.mxu0
        %2943 = vmatprep.mubr.bf16.mxu0 0
        %2944 = vmatmul.mubr.bf16.gmra.mxu0 %v2797
        %v2945 = vpop.f32.mrf.mxu0
        %v2946 = vadd.f32 %v2821, %v2945
        %v2947 = vpop.f32.mrf.mxu0
        %v2948 = vpop.f32.mrf.mxu0
        %v2949 = vadd.f32 %v2821, %v2948
        %v2950 = vpop.f32.mrf.mxu0
        %2951 = vmatprep.mubr.bf16.mxu0 0
        %2952 = vmatmul.mubr.bf16.gmra.mxu0 %v2798
        %v2953 = vpop.f32.mrf.mxu0
        %v2954 = vadd.f32 %v2821, %v2953
        %v2955 = vpop.f32.mrf.mxu0
        %v2956 = vpop.f32.mrf.mxu0
        %v2957 = vadd.f32 %v2821, %v2956
        %v2958 = vpop.f32.mrf.mxu0
        %2959 = vmatprep.mubr.bf16.mxu0 0
        %2960 = vmatmul.mubr.bf16.gmra.mxu0 %v2799
        %v2961 = vpop.f32.mrf.mxu0
        %v2962 = vadd.f32 %v2821, %v2961
        %v2963 = vpop.f32.mrf.mxu0
        %v2964 = vpop.f32.mrf.mxu0
        %v2965 = vadd.f32 %v2821, %v2964
        %v2966 = vpop.f32.mrf.mxu0
        %2967 = vdwg.mxu0
        %v2968 = vmax.f32 %v2906, 0.0
        %v2969 = vmax.f32 %v2909, 0.0
        %v2970 = vmax.f32 %v2914, 0.0
        %v2971 = vmax.f32 %v2917, 0.0
        %v2972 = vmax.f32 %v2922, 0.0
        %v2973 = vmax.f32 %v2925, 0.0
        %v2974 = vmax.f32 %v2930, 0.0
        %v2975 = vmax.f32 %v2933, 0.0
        %v2976 = vmax.f32 %v2938, 0.0
        %v2977 = vmax.f32 %v2941, 0.0
        %v2978 = vmax.f32 %v2946, 0.0
        %v2979 = vmax.f32 %v2949, 0.0
        %v2980 = vmax.f32 %v2954, 0.0
        %v2981 = vmax.f32 %v2957, 0.0
        %v2982 = vmax.f32 %v2962, 0.0
        %v2983 = vmax.f32 %v2965, 0.0
        %2984 = vst [vmem:[%s298] sm:$0xff] %v2968
        %2985 = vst [vmem:[%s298 + $0x8] sm:$0xff] %v2969
        %2986 = vst [vmem:[%s298 + $0x10] sm:$0xff] %v2970
        %2987 = vst [vmem:[%s298 + $0x18] sm:$0xff] %v2971
        %2988 = vst [vmem:[%s298 + $0x20] sm:$0xff] %v2972
        %2989 = vst [vmem:[%s298 + $0x28] sm:$0xff] %v2973
        %2990 = vst [vmem:[%s298 + $0x30] sm:$0xff] %v2974
        %2991 = vst [vmem:[%s298 + $0x38] sm:$0xff] %v2975
        %2992 = vst [vmem:[%s298 + $0x40] sm:$0xff] %v2976
        %2993 = vst [vmem:[%s298 + $0x48] sm:$0xff] %v2977
        %2994 = vst [vmem:[%s298 + $0x50] sm:$0xff] %v2978
        %2995 = vst [vmem:[%s298 + $0x58] sm:$0xff] %v2979
        %2996 = vst [vmem:[%s298 + $0x60] sm:$0xff] %v2980
        %2997 = vst [vmem:[%s298 + $0x68] sm:$0xff] %v2981
        %2998 = vst [vmem:[%s298 + $0x70] sm:$0xff] %v2982
        %2999 = vst [vmem:[%s298 + $0x78] sm:$0xff] %v2983
        %s3000 = smul.u32 16, %s19
        %p3001 = scmp.lt.s32.totalorder %s3000, 31
        %s3002 = scalar_select %p3001, %s3000, 31
        %s3003 = smul.addr %s3002, 8
        %s3004 = scalar_lea.vmem %s7, %s3003
        // Predicated region
        $region53: #{debase_encoder_forward.1} parent=47 // pred_check
          %p3005 = pneg %p189
        $region54: #{debase_encoder_forward.1} parent=47 // pred_check_branch
          %3007 = sbr.rel (%p3005) target = $region56
        $region55: #{debase_encoder_forward.1} parent=47 // pred_region
          %s3008 = smul.u32 16, %s19
        $region56: #{debase_encoder_forward.1} parent=47 // pred_fallthru
          _
      $region48: #{debase_encoder_forward.1} parent=5 // pred_fallthru
        _
      %p3009 = scmp.le.s32.totalorder 2, %s14
      // Predicated region
      $region57: #{debase_encoder_forward.1} parent=5 // pred_check
        %p3010 = pneg %p3009
      $region58: #{debase_encoder_forward.1} parent=5 // pred_check_branch
        %3012 = sbr.rel (%p3010) target = $region60
      $region59: #{debase_encoder_forward.1} parent=5 // pred_region
        %s3013 = ssub.s32 %s14, 2
        // Predicated region
        $region61: #{debase_encoder_forward.1} parent=59 // pred_check
          %p3014 = pneg %p195
        $region62: #{debase_encoder_forward.1} parent=59 // pred_check_branch
          %3016 = sbr.rel (%p3014) target = $region64
        $region63: #{debase_encoder_forward.1} parent=59 // pred_region
          %s3017 = smul.u32 16, %s20
          %p3018 = scmp.lt.s32.totalorder %s3017, 31
          %s3019 = scalar_select %p3018, %s3017, 31
          %s3020 = smul.addr %s3019, 8
          %s3021 = scalar_lea.vmem %s7, %s3020
        $region64: #{debase_encoder_forward.1} parent=59 // pred_fallthru
          _
      $region60: #{debase_encoder_forward.1} parent=5 // pred_fallthru
        _
    $region6: #{debase_encoder_forward.1} parent=1 // loop_footer
      %s18 = sadd.s32 1, %s14
    $region7: #{debase_encoder_forward.1} parent=1 // loop_footer_branch
      %13 = sbr.rel target = $region3
    $region8: #{debase_encoder_forward.1} parent=1 // loop_exit
      _
    %3022 = vsyncpa [#allocation3], 1
    %s3023 = scalar_lea.sflag [#allocation3], 1
    %3024 = vsyncpa %s3023, 1

</llo_original>
